<compile_context>
chip_gen: v7x
topology: tpu7x:2x2x1
jax: 0.10.0
libtpu: 0.0.40
codegen_flags: <defaults>
</compile_context>

<pallas_src>
import jax
import jax.numpy as jnp
from jax.experimental import pallas as pl
from jax.experimental.pallas import tpu as pltpu


def _round_up(n, m):
    return (n + m - 1) // m * m


def _tpu_limits():
    """Returns (physical VMEM bytes per TensorCore, has_megacore)."""
    vmem = 128 << 20
    kind = ""
    try:
        kind = getattr(jax.devices()[0], "device_kind", "").lower()
    except Exception:
        pass
    if "v7" in kind:
        vmem = 64 << 20                      # v7x: 64 MiB per TC
    megacore = ("v7" in kind) or ("v4" in kind)
    try:
        info_v = int(getattr(pltpu.get_tpu_info(), "vmem_capacity_bytes", vmem))
        if info_v > 0:
            vmem = min(vmem, info_v)
    except Exception:
        pass
    return max(32 << 20, min(vmem, 128 << 20)), megacore


def _vmem_need(tm, tk, hp, ep, n, x_itemsize):
    """Exact VMEM footprint for one (tm, tk) choice.

    Constants are counted double-buffered to stay conservative even if the
    Buffered(1) pipeline mode is unavailable in this JAX version.
    """
    return (n * 2 * tm * tk * x_itemsize            # x streams, double-buffered
            + 2 * tk * hp * 2                       # w1 (bf16), double-buffered
            + 2 * (hp * 4 + hp * ep * 2 + ep * 4)   # b1 / w2 / b2 constants
            + n * 2 * tm * ep * 4                   # f32 outputs, double-buffered
            + n * tm * hp * 4)                      # f32 accumulator scratch


def _plan_tiles(b, f_pad, hp, ep, n, x_itemsize):
    """Pick (tm, tk, b_pad, vmem_limit) for this batch / generation."""
    vmem_cap, megacore = _tpu_limits()
    budget = min(vmem_cap - (8 << 20), int(vmem_cap * 0.85))

    b_pad0 = _round_up(max(b, 8), 8)

    tk_opts = [t for t in (4096, 2048, 1024, 512, 256, 128) if f_pad % t == 0]
    if f_pad <= 4096 and f_pad not in tk_opts:
        tk_opts.append(f_pad)                       # single K step for small F
    if not tk_opts:
        tk_opts = [f_pad]
    tk_opts = sorted(set(tk_opts), reverse=True)

    tm_opts = [t for t in (512, 256, 128, 64, 32, 16, 8) if t <= b_pad0]

    best_key, best = None, None
    for tm in tm_opts:
        b_pad = _round_up(b_pad0, tm)
        m_blocks = b_pad // tm
        # Total HBM traffic: x streams (incl. batch-pad waste) + W1 re-streamed
        # once per M block + f32 outputs.
        hbm_bytes = (n * b_pad * f_pad * x_itemsize
                     + m_blocks * f_pad * hp * 2
                     + n * b_pad * ep * 4)
        mega_ok = (not megacore) or (m_blocks >= 2) or (b_pad0 < 16)
        for tk in tk_opts:
            need = _vmem_need(tm, tk, hp, ep, n, x_itemsize)
            if need > budget:
                continue
            key = (mega_ok, -hbm_bytes, tk, tm)
            if best_key is None or key > best_key:
                best_key, best = key, (tm, tk, b_pad, need)

    if best is None:
        # Nothing fits the budget: fall back to the smallest footprint combo.
        tm, tk = tm_opts[-1], tk_opts[-1]
        best = (tm, tk, _round_up(b_pad0, tm),
                _vmem_need(tm, tk, hp, ep, n, x_itemsize))

    tm, tk, b_pad, need = best
    # Exact need + fixed headroom for compiler-internal scratch, capped below
    # physical VMEM (leaves ~8 MiB slack: ~56 MiB on v7x, ~120 MiB v5e/v6e).
    vmem_limit = int(max(16 << 20, min(need + (4 << 20), vmem_cap - (8 << 20))))
    return tm, tk, b_pad, vmem_limit


def _const_spec(shape):
    """BlockSpec for a grid-invariant (constant) block; single-buffered."""
    idx = lambda i, k: (0, 0)
    try:
        return pl.BlockSpec(shape, idx, pipeline_mode=pl.Buffered(1))
    except TypeError:   # pipeline_mode not supported in this JAX version
        return pl.BlockSpec(shape, idx)


def _make_mlp_kernel(n_streams):
    """Fused relu(x @ W1 + b1) @ W2 + b2 for `n_streams` batched inputs."""

    def kernel(*refs):
        x_refs = refs[:n_streams]
        w1_ref, b1_ref, w2_ref, b2_ref = refs[n_streams:n_streams + 4]
        o_refs = refs[n_streams + 4:2 * n_streams + 4]
        acc_refs = refs[2 * n_streams + 4:]

        k = pl.program_id(1)

        @pl.when(k == 0)
        def _init():
            # Fold the first bias into the accumulator init (free VALU relief).
            b1 = b1_ref[...]                                  # (1, Hp) f32
            for acc in acc_refs:
                acc[...] = jnp.broadcast_to(b1, acc.shape)

        w1 = w1_ref[...].astype(jnp.bfloat16)                  # (TK, Hp)
        for x_ref, acc in zip(x_refs, acc_refs):
            acc[...] += jnp.dot(x_ref[...].astype(jnp.bfloat16), w1,
                                preferred_element_type=jnp.float32)

        @pl.when(k == pl.num_programs(1) - 1)
        def _finalize():
            w2 = w2_ref[...].astype(jnp.bfloat16)              # (Hp, Ep)
            b2 = b2_ref[...]                                   # (1, Ep) f32
            for acc, o_ref in zip(acc_refs, o_refs):
                h = jnp.maximum(acc[...], 0.0).astype(jnp.bfloat16)
                z = jnp.dot(h, w2, preferred_element_type=jnp.float32) + b2
                o_ref[...] = z.astype(o_ref.dtype)

    return kernel


def _fused_embed(inputs, w1, b1, w2, b2, tm, tk, vmem_limit):
    """inputs: tuple of (B_pad, F_pad) arrays (already flattened & padded)."""
    n = len(inputs)
    b_pad, f_pad = inputs[0].shape
    hp, ep = w2.shape
    assert b_pad % tm == 0 and f_pad % tk == 0
    grid = (b_pad // tm, f_pad // tk)
    m_blocks = grid[0]
    x_bytes = jnp.dtype(inputs[0].dtype).itemsize

    in_specs = (
        [pl.BlockSpec((tm, tk), lambda i, k: (i, k)) for _ in range(n)]
        + [pl.BlockSpec((tk, hp), lambda i, k: (k, 0)),
           _const_spec((1, hp)),
           _const_spec((hp, ep)),
           _const_spec((1, ep))]
    )
    out_specs = [pl.BlockSpec((tm, ep), lambda i, k: (i, 0)) for _ in range(n)]
    out_shape = [jax.ShapeDtypeStruct((b_pad, ep), jnp.float32) for _ in range(n)]
    scratch = [pltpu.VMEM((tm, hp), jnp.float32) for _ in range(n)]

    cost = pl.CostEstimate(
        flops=2 * n * b_pad * (f_pad * hp + hp * ep),
        transcendentals=0,
        bytes_accessed=(n * b_pad * f_pad * x_bytes
                        + m_blocks * f_pad * hp * 2        # W1 streamed per M block
                        + hp * 4 + hp * ep * 2 + ep * 4
                        + n * b_pad * ep * 4),
    )

    return pl.pallas_call(
        _make_mlp_kernel(n),
        out_shape=out_shape,
        grid_spec=pltpu.PrefetchScalarGridSpec(
            num_scalar_prefetch=0,
            grid=grid,
            in_specs=in_specs,
            out_specs=out_specs,
            scratch_shapes=scratch,
        ),
        compiler_params=pltpu.CompilerParams(
            dimension_semantics=("parallel", "arbitrary"),
            vmem_limit_bytes=vmem_limit,
        ),
        cost_estimate=cost,
    )(*inputs, w1, b1, w2, b2)


class TripletLossModelPallas:
    """JAX/Pallas equivalent of TripetLossModel.forward."""

    def __init__(self, in_features, hidden, embed_dim, key, margin=1.0):
        # TODO(synk): losses.tripet_loss / margin are stored by the PyTorch
        # module but never used in forward(); forward only returns embeddings.
        self.margin = margin
        self.in_features = in_features
        self.hidden = hidden
        self.embed_dim = embed_dim

        hp = _round_up(hidden, 128)
        ep = _round_up(embed_dim, 128)
        # Pad F so the K axis tiles cleanly (512-aligned for large F, lane-
        # aligned otherwise) -- zero feature rows contribute nothing.
        f_pad = (_round_up(in_features, 512) if in_features > 4096
                 else _round_up(in_features, 128))
        self._hp, self._ep, self._fp = hp, ep, f_pad

        k1, k2, k3, k4 = jax.random.split(key, 4)
        # PyTorch-style Linear init: U(-1/sqrt(fan_in), 1/sqrt(fan_in))
        lim1 = 1.0 / jnp.sqrt(in_features)
        lim2 = 1.0 / jnp.sqrt(hidden)
        w1 = jax.random.uniform(k1, (in_features, hidden), jnp.float32, -lim1, lim1)
        b1 = jax.random.uniform(k2, (hidden,), jnp.float32, -lim1, lim1)
        w2 = jax.random.uniform(k3, (hidden, embed_dim), jnp.float32, -lim2, lim2)
        b2 = jax.random.uniform(k4, (embed_dim,), jnp.float32, -lim2, lim2)

        # Lane-dense, zero-padded, MXU-friendly parameter copies (bf16 weights,
        # f32 biases).  Zero padding never leaks into the real output columns.
        self.w1 = (jnp.zeros((f_pad, hp), jnp.bfloat16)
                   .at[:in_features, :hidden].set(w1.astype(jnp.bfloat16)))
        self.b1 = jnp.zeros((1, hp), jnp.float32).at[0, :hidden].set(b1)
        self.w2 = (jnp.zeros((hp, ep), jnp.bfloat16)
                   .at[:hidden, :embed_dim].set(w2.astype(jnp.bfloat16)))
        self.b2 = jnp.zeros((1, ep), jnp.float32).at[0, :embed_dim].set(b2)

    def _prepare(self, arrays):
        """Flatten NCHW->2D and pad batch/feature axes under ONE shared plan."""
        b = arrays[0].shape[0]
        x_itemsize = jnp.dtype(arrays[0].dtype).itemsize
        tm, tk, b_pad, vmem_limit = _plan_tiles(
            b, self._fp, self._hp, self._ep, len(arrays), x_itemsize)
        padded = []
        for a in arrays:
            a2 = a.reshape(a.shape[0], -1)          # same order as .view(B, -1)
            assert a2.shape[1] == self.in_features
            a2 = jnp.pad(a2, ((0, b_pad - b), (0, self._fp - a2.shape[1])))
            padded.append(a2)
        return padded, tm, tk, vmem_limit

    def get_embedding(self, x):
        b = x.shape[0]
        (xp,), tm, tk, vl = self._prepare((x,))
        (z,) = _fused_embed((xp,), self.w1, self.b1, self.w2, self.b2, tm, tk, vl)
        return z[:b, :self.embed_dim]

    def forward(self, x, pos_x, neg_x):
        b = x.shape[0]
        padded, tm, tk, vl = self._prepare((x, pos_x, neg_x))
        z, pz, nz = _fused_embed(tuple(padded), self.w1, self.b1, self.w2,
                                 self.b2, tm, tk, vl)
        return (z[:b, :self.embed_dim],
                pz[:b, :self.embed_dim],
                nz[:b, :self.embed_dim])

    __call__ = forward


if __name__ == "__main__":
    # Small shapes consistent with an image-embedding net.
    B, C, Hs, Ws = 2, 4, 16, 16
    F = C * Hs * Ws          # 1024
    HID = 128
    EMB = 32

    key = jax.random.PRNGKey(0)
    kx, kp, kn, kparams = jax.random.split(key, 4)

    x = jax.random.normal(kx, (B, C, Hs, Ws), jnp.float32)
    pos_x = jax.random.normal(kp, (B, C, Hs, Ws), jnp.float32)
    neg_x = jax.random.normal(kn, (B, C, Hs, Ws), jnp.float32)

    model = TripletLossModelPallas(F, HID, EMB, kparams)

    z, pz, nz = model(x, pos_x, neg_x)
    jax.block_until_ready((z, pz, nz))

    # Reference check against plain JAX using the same bf16 weights / f32 acc.
    def ref_embed(inp):
        xb = inp.reshape(inp.shape[0], -1)
        xb = jnp.pad(xb, ((0, 0), (0, model._fp - xb.shape[1])))
        h = jnp.maximum(
            jnp.dot(xb.astype(jnp.bfloat16), model.w1,
                    preferred_element_type=jnp.float32) + model.b1, 0.0)
        zz = jnp.dot(h.astype(jnp.bfloat16), model.w2,
                     preferred_element_type=jnp.float32) + model.b2
        return zz[:, :EMB]

    for got, inp in ((z, x), (pz, pos_x), (nz, neg_x)):
        want = ref_embed(inp)
        assert got.shape == want.shape
        assert jnp.allclose(got, want, atol=2e-2, rtol=2e-2), float(
            jnp.max(jnp.abs(got - want)))

    # Also exercise the single-stream get_embedding path.
    e = model.get_embedding(x)
    jax.block_until_ready(e)
    assert jnp.allclose(e, z, atol=1e-3, rtol=1e-3)

    assert z.shape == (B, EMB) and pz.shape == (B, EMB) and nz.shape == (B, EMB)
    print("KERNEL_OK")
</pallas_src>

<mosaic_0001>
module attributes {stable_mosaic.version = 11 : i64} {
  func.func @kernel(%arg0: i32, %arg1: i32, %arg2: memref<8x1024xf32, #tpu.memory_space<vmem>>, %arg3: memref<8x1024xf32, #tpu.memory_space<vmem>>, %arg4: memref<8x1024xf32, #tpu.memory_space<vmem>>, %arg5: memref<1024x128xbf16, #tpu.memory_space<vmem>>, %arg6: memref<1x128xf32, #tpu.memory_space<vmem>>, %arg7: memref<128x128xbf16, #tpu.memory_space<vmem>>, %arg8: memref<1x128xf32, #tpu.memory_space<vmem>>, %arg9: memref<8x128xf32, #tpu.memory_space<vmem>>, %arg10: memref<8x128xf32, #tpu.memory_space<vmem>>, %arg11: memref<8x128xf32, #tpu.memory_space<vmem>>, %arg12: memref<8x128xf32, #tpu.memory_space<vmem>>, %arg13: memref<8x128xf32, #tpu.memory_space<vmem>>, %arg14: memref<8x128xf32, #tpu.memory_space<vmem>>) attributes {dimension_semantics = [#tpu.dimension_semantics<parallel>, #tpu.dimension_semantics<arbitrary>], iteration_bounds = array<i64: 1, 1>, scalar_prefetch = 0 : i64, scratch_operands = 3 : i64, tpu.core_type = #tpu.core_type<tc>, window_params = [{transform_indices = @transform_0, window_bounds = array<i64: 8, 1024>}, {transform_indices = @transform_1, window_bounds = array<i64: 8, 1024>}, {transform_indices = @transform_2, window_bounds = array<i64: 8, 1024>}, {transform_indices = @transform_3, window_bounds = array<i64: 1024, 128>}, {pipeline_mode = #tpu.pipeline_mode<synchronous>, transform_indices = @transform_4, window_bounds = array<i64: 1, 128>}, {pipeline_mode = #tpu.pipeline_mode<synchronous>, transform_indices = @transform_5, window_bounds = array<i64: 128, 128>}, {pipeline_mode = #tpu.pipeline_mode<synchronous>, transform_indices = @transform_6, window_bounds = array<i64: 1, 128>}, {transform_indices = @transform_7, window_bounds = array<i64: 8, 128>}, {transform_indices = @transform_8, window_bounds = array<i64: 8, 128>}, {transform_indices = @transform_9, window_bounds = array<i64: 8, 128>}]} {
    %c0_i32 = arith.constant 0 : i32
    %0 = arith.cmpi eq, %arg1, %c0_i32 : i32
    %1 = arith.extui %0 : i1 to i32
    %c0_i32_0 = arith.constant 0 : i32
    %2 = arith.cmpi ne, %1, %c0_i32_0 : i32
    scf.if %2 {
      %c0_24 = arith.constant 0 : index
      %c0_25 = arith.constant 0 : index
      %25 = vector.load %arg6[%c0_24, %c0_25] : memref<1x128xf32, #tpu.memory_space<vmem>>, vector<1x128xf32>
      %26 = vector.shape_cast %25 : vector<1x128xf32> to vector<1x128xf32>
      %27 = vector.broadcast %26 : vector<1x128xf32> to vector<8x128xf32>
      %c0_26 = arith.constant 0 : index
      %c0_27 = arith.constant 0 : index
      %28 = vector.load %arg12[%c0_26, %c0_27] : memref<8x128xf32, #tpu.memory_space<vmem>>, vector<8x128xf32>
      tpu.vector_store %arg12[%c0_26, %c0_27], %27 {strides = array<i32>} : memref<8x128xf32, #tpu.memory_space<vmem>>, vector<8x128xf32>,
      %29 = vector.shape_cast %25 : vector<1x128xf32> to vector<1x128xf32>
      %30 = vector.broadcast %29 : vector<1x128xf32> to vector<8x128xf32>
      %c0_28 = arith.constant 0 : index
      %c0_29 = arith.constant 0 : index
      %31 = vector.load %arg13[%c0_28, %c0_29] : memref<8x128xf32, #tpu.memory_space<vmem>>, vector<8x128xf32>
      tpu.vector_store %arg13[%c0_28, %c0_29], %30 {strides = array<i32>} : memref<8x128xf32, #tpu.memory_space<vmem>>, vector<8x128xf32>,
      %32 = vector.shape_cast %25 : vector<1x128xf32> to vector<1x128xf32>
      %33 = vector.broadcast %32 : vector<1x128xf32> to vector<8x128xf32>
      %c0_30 = arith.constant 0 : index
      %c0_31 = arith.constant 0 : index
      %34 = vector.load %arg14[%c0_30, %c0_31] : memref<8x128xf32, #tpu.memory_space<vmem>>, vector<8x128xf32>
      tpu.vector_store %arg14[%c0_30, %c0_31], %33 {strides = array<i32>} : memref<8x128xf32, #tpu.memory_space<vmem>>, vector<8x128xf32>,
    } else {
    }
    %c0 = arith.constant 0 : index
    %c0_1 = arith.constant 0 : index
    %3 = vector.load %arg5[%c0, %c0_1] : memref<1024x128xbf16, #tpu.memory_space<vmem>>, vector<1024x128xbf16>
    %c0_2 = arith.constant 0 : index
    %c0_3 = arith.constant 0 : index
    %4 = vector.load %arg12[%c0_2, %c0_3] : memref<8x128xf32, #tpu.memory_space<vmem>>, vector<8x128xf32>
    %c0_4 = arith.constant 0 : index
    %c0_5 = arith.constant 0 : index
    %5 = vector.load %arg2[%c0_4, %c0_5] : memref<8x1024xf32, #tpu.memory_space<vmem>>, vector<8x1024xf32>
    %6 = arith.truncf %5 : vector<8x1024xf32> to vector<8x1024xbf16>
    %cst = arith.constant dense<0.000000e+00> : vector<8x128xf32>
    %7 = tpu.matmul %6, %3, %cst {dimension_numbers = #tpu.dot_dimension_numbers<[1], [0], [0], [1], [0, 0, 1, 1], [], []>} : vector<8x1024xbf16>, vector<1024x128xbf16>, vector<8x128xf32> -> vector<8x128xf32>
    %8 = arith.addf %4, %7 : vector<8x128xf32>
    %c0_6 = arith.constant 0 : index
    %c0_7 = arith.constant 0 : index
    %9 = vector.load %arg12[%c0_6, %c0_7] : memref<8x128xf32, #tpu.memory_space<vmem>>, vector<8x128xf32>
    tpu.vector_store %arg12[%c0_6, %c0_7], %8 {strides = array<i32>} : memref<8x128xf32, #tpu.memory_space<vmem>>, vector<8x128xf32>,
    %c0_8 = arith.constant 0 : index
    %c0_9 = arith.constant 0 : index
    %10 = vector.load %arg13[%c0_8, %c0_9] : memref<8x128xf32, #tpu.memory_space<vmem>>, vector<8x128xf32>
    %c0_10 = arith.constant 0 : index
    %c0_11 = arith.constant 0 : index
    %11 = vector.load %arg3[%c0_10, %c0_11] : memref<8x1024xf32, #tpu.memory_space<vmem>>, vector<8x1024xf32>
    %12 = arith.truncf %11 : vector<8x1024xf32> to vector<8x1024xbf16>
    %cst_12 = arith.constant dense<0.000000e+00> : vector<8x128xf32>
    %13 = tpu.matmul %12, %3, %cst_12 {dimension_numbers = #tpu.dot_dimension_numbers<[1], [0], [0], [1], [0, 0, 1, 1], [], []>} : vector<8x1024xbf16>, vector<1024x128xbf16>, vector<8x128xf32> -> vector<8x128xf32>
    %14 = arith.addf %10, %13 : vector<8x128xf32>
    %c0_13 = arith.constant 0 : index
    %c0_14 = arith.constant 0 : index
    %15 = vector.load %arg13[%c0_13, %c0_14] : memref<8x128xf32, #tpu.memory_space<vmem>>, vector<8x128xf32>
    tpu.vector_store %arg13[%c0_13, %c0_14], %14 {strides = array<i32>} : memref<8x128xf32, #tpu.memory_space<vmem>>, vector<8x128xf32>,
    %c0_15 = arith.constant 0 : index
    %c0_16 = arith.constant 0 : index
    %16 = vector.load %arg14[%c0_15, %c0_16] : memref<8x128xf32, #tpu.memory_space<vmem>>, vector<8x128xf32>
    %c0_17 = arith.constant 0 : index
    %c0_18 = arith.constant 0 : index
    %17 = vector.load %arg4[%c0_17, %c0_18] : memref<8x1024xf32, #tpu.memory_space<vmem>>, vector<8x1024xf32>
    %18 = arith.truncf %17 : vector<8x1024xf32> to vector<8x1024xbf16>
    %cst_19 = arith.constant dense<0.000000e+00> : vector<8x128xf32>
    %19 = tpu.matmul %18, %3, %cst_19 {dimension_numbers = #tpu.dot_dimension_numbers<[1], [0], [0], [1], [0, 0, 1, 1], [], []>} : vector<8x1024xbf16>, vector<1024x128xbf16>, vector<8x128xf32> -> vector<8x128xf32>
    %20 = arith.addf %16, %19 : vector<8x128xf32>
    %c0_20 = arith.constant 0 : index
    %c0_21 = arith.constant 0 : index
    %21 = vector.load %arg14[%c0_20, %c0_21] : memref<8x128xf32, #tpu.memory_space<vmem>>, vector<8x128xf32>
    tpu.vector_store %arg14[%c0_20, %c0_21], %20 {strides = array<i32>} : memref<8x128xf32, #tpu.memory_space<vmem>>, vector<8x128xf32>,
    %c0_i32_22 = arith.constant 0 : i32
    %22 = arith.cmpi eq, %arg1, %c0_i32_22 : i32
    %23 = arith.extui %22 : i1 to i32
    %c0_i32_23 = arith.constant 0 : i32
    %24 = arith.cmpi ne, %23, %c0_i32_23 : i32
    scf.if %24 {
      %c0_24 = arith.constant 0 : index
      %c0_25 = arith.constant 0 : index
      %25 = vector.load %arg7[%c0_24, %c0_25] : memref<128x128xbf16, #tpu.memory_space<vmem>>, vector<128x128xbf16>
      %c0_26 = arith.constant 0 : index
      %c0_27 = arith.constant 0 : index
      %26 = vector.load %arg8[%c0_26, %c0_27] : memref<1x128xf32, #tpu.memory_space<vmem>>, vector<1x128xf32>
      %c0_28 = arith.constant 0 : index
      %c0_29 = arith.constant 0 : index
      %27 = vector.load %arg12[%c0_28, %c0_29] : memref<8x128xf32, #tpu.memory_space<vmem>>, vector<8x128xf32>
      %cst_30 = arith.constant 0.000000e+00 : f32
      %28 = vector.broadcast %cst_30 : f32 to vector<8x128xf32>
      %29 = arith.maximumf %27, %28 : vector<8x128xf32>
      %30 = arith.truncf %29 : vector<8x128xf32> to vector<8x128xbf16>
      %cst_31 = arith.constant dense<0.000000e+00> : vector<8x128xf32>
      %31 = tpu.matmul %30, %25, %cst_31 {dimension_numbers = #tpu.dot_dimension_numbers<[1], [0], [0], [1], [0, 0, 1, 1], [], []>} : vector<8x128xbf16>, vector<128x128xbf16>, vector<8x128xf32> -> vector<8x128xf32>
      %32 = vector.broadcast %26 : vector<1x128xf32> to vector<8x128xf32>
      %33 = arith.addf %31, %32 : vector<8x128xf32>
      %c0_32 = arith.constant 0 : index
      %c0_33 = arith.constant 0 : index
      %34 = vector.load %arg9[%c0_32, %c0_33] : memref<8x128xf32, #tpu.memory_space<vmem>>, vector<8x128xf32>
      tpu.vector_store %arg9[%c0_32, %c0_33], %33 {strides = array<i32>} : memref<8x128xf32, #tpu.memory_space<vmem>>, vector<8x128xf32>,
      %c0_34 = arith.constant 0 : index
      %c0_35 = arith.constant 0 : index
      %35 = vector.load %arg13[%c0_34, %c0_35] : memref<8x128xf32, #tpu.memory_space<vmem>>, vector<8x128xf32>
      %cst_36 = arith.constant 0.000000e+00 : f32
      %36 = vector.broadcast %cst_36 : f32 to vector<8x128xf32>
      %37 = arith.maximumf %35, %36 : vector<8x128xf32>
      %38 = arith.truncf %37 : vector<8x128xf32> to vector<8x128xbf16>
      %cst_37 = arith.constant dense<0.000000e+00> : vector<8x128xf32>
      %39 = tpu.matmul %38, %25, %cst_37 {dimension_numbers = #tpu.dot_dimension_numbers<[1], [0], [0], [1], [0, 0, 1, 1], [], []>} : vector<8x128xbf16>, vector<128x128xbf16>, vector<8x128xf32> -> vector<8x128xf32>
      %40 = vector.broadcast %26 : vector<1x128xf32> to vector<8x128xf32>
      %41 = arith.addf %39, %40 : vector<8x128xf32>
      %c0_38 = arith.constant 0 : index
      %c0_39 = arith.constant 0 : index
      %42 = vector.load %arg10[%c0_38, %c0_39] : memref<8x128xf32, #tpu.memory_space<vmem>>, vector<8x128xf32>
      tpu.vector_store %arg10[%c0_38, %c0_39], %41 {strides = array<i32>} : memref<8x128xf32, #tpu.memory_space<vmem>>, vector<8x128xf32>,
      %c0_40 = arith.constant 0 : index
      %c0_41 = arith.constant 0 : index
      %43 = vector.load %arg14[%c0_40, %c0_41] : memref<8x128xf32, #tpu.memory_space<vmem>>, vector<8x128xf32>
      %cst_42 = arith.constant 0.000000e+00 : f32
      %44 = vector.broadcast %cst_42 : f32 to vector<8x128xf32>
      %45 = arith.maximumf %43, %44 : vector<8x128xf32>
      %46 = arith.truncf %45 : vector<8x128xf32> to vector<8x128xbf16>
      %cst_43 = arith.constant dense<0.000000e+00> : vector<8x128xf32>
      %47 = tpu.matmul %46, %25, %cst_43 {dimension_numbers = #tpu.dot_dimension_numbers<[1], [0], [0], [1], [0, 0, 1, 1], [], []>} : vector<8x128xbf16>, vector<128x128xbf16>, vector<8x128xf32> -> vector<8x128xf32>
      %48 = vector.broadcast %26 : vector<1x128xf32> to vector<8x128xf32>
      %49 = arith.addf %47, %48 : vector<8x128xf32>
      %c0_44 = arith.constant 0 : index
      %c0_45 = arith.constant 0 : index
      %50 = vector.load %arg11[%c0_44, %c0_45] : memref<8x128xf32, #tpu.memory_space<vmem>>, vector<8x128xf32>
      tpu.vector_store %arg11[%c0_44, %c0_45], %49 {strides = array<i32>} : memref<8x128xf32, #tpu.memory_space<vmem>>, vector<8x128xf32>,
    } else {
    }
    return
  }
  func.func @transform_0(%arg0: i32, %arg1: i32) -> (i32, i32) {
    %c0_i32 = arith.constant 0 : i32
    return %arg0, %arg1 : i32, i32
  }
  func.func @transform_1(%arg0: i32, %arg1: i32) -> (i32, i32) {
    %c0_i32 = arith.constant 0 : i32
    return %arg0, %arg1 : i32, i32
  }
  func.func @transform_2(%arg0: i32, %arg1: i32) -> (i32, i32) {
    %c0_i32 = arith.constant 0 : i32
    return %arg0, %arg1 : i32, i32
  }
  func.func @transform_3(%arg0: i32, %arg1: i32) -> (i32, i32) {
    %c0_i32 = arith.constant 0 : i32
    %c0_i32_0 = arith.constant 0 : i32
    return %arg1, %c0_i32 : i32, i32
  }
  func.func @transform_4(%arg0: i32, %arg1: i32) -> (i32, i32) {
    %c0_i32 = arith.constant 0 : i32
    %c0_i32_0 = arith.constant 0 : i32
    %c0_i32_1 = arith.constant 0 : i32
    return %c0_i32, %c0_i32_0 : i32, i32
  }
  func.func @transform_5(%arg0: i32, %arg1: i32) -> (i32, i32) {
    %c0_i32 = arith.constant 0 : i32
    %c0_i32_0 = arith.constant 0 : i32
    %c0_i32_1 = arith.constant 0 : i32
    return %c0_i32, %c0_i32_0 : i32, i32
  }
  func.func @transform_6(%arg0: i32, %arg1: i32) -> (i32, i32) {
    %c0_i32 = arith.constant 0 : i32
    %c0_i32_0 = arith.constant 0 : i32
    %c0_i32_1 = arith.constant 0 : i32
    return %c0_i32, %c0_i32_0 : i32, i32
  }
  func.func @transform_7(%arg0: i32, %arg1: i32) -> (i32, i32) {
    %c0_i32 = arith.constant 0 : i32
    %c0_i32_0 = arith.constant 0 : i32
    return %arg0, %c0_i32 : i32, i32
  }
  func.func @transform_8(%arg0: i32, %arg1: i32) -> (i32, i32) {
    %c0_i32 = arith.constant 0 : i32
    %c0_i32_0 = arith.constant 0 : i32
    return %arg0, %c0_i32 : i32, i32
  }
  func.func @transform_9(%arg0: i32, %arg1: i32) -> (i32, i32) {
    %c0_i32 = arith.constant 0 : i32
    %c0_i32_0 = arith.constant 0 : i32
    return %arg0, %c0_i32 : i32, i32
  }
}

</mosaic_0001>

<llo_original>
// kernel: tpu_custom_call.1
$region0: #{tpu_custom_call.1}
  #allocation0 [shape = 'u32[]', space=smem, size = 0x4, offset = 0x4, fixed_abs, tag = 'smem constant byte address 0x4 - core index']
  #allocation1 [shape = 'u32[144,128]{1,0:T(1,128)}', space=vmem, size = 0x12000, scoped, tag = 'internal scratch']
  #allocation2 [shape = 'f32[8,128]{1,0:T(8,128)}', space=vmem, size = 0x1000, scoped, tag = 'scratch operand']
  #allocation3 [shape = 'f32[8,128]{1,0:T(8,128)}', space=vmem, size = 0x1000, scoped, tag = 'scratch operand']
  #allocation4 [shape = 'f32[8,128]{1,0:T(8,128)}', space=vmem, size = 0x1000, scoped, tag = 'scratch operand']
  %s0 = inlined_call_operand.hbm [shape: f32[8,1024], index: 0, kind: input, shape index: {}]
  %s1 = inlined_call_operand.hbm [shape: f32[8,1024], index: 1, kind: input, shape index: {}]
  %s2 = inlined_call_operand.hbm [shape: f32[8,1024], index: 2, kind: input, shape index: {}]
  %s3 = inlined_call_operand.hbm [shape: bf16[1024,128], index: 3, kind: input, shape index: {}]
  %s4 = inlined_call_operand.vmem [shape: f32[1,128], index: 4, kind: input, shape index: {}]
  %s5 = inlined_call_operand.hbm [shape: bf16[128,128], index: 5, kind: input, shape index: {}]
  %s6 = inlined_call_operand.vmem [shape: f32[1,128], index: 6, kind: input, shape index: {}]
  %s7 = inlined_call_operand.hbm [shape: f32[8,128], index: 7, kind: output, shape index: {0}]
  %s8 = inlined_call_operand.hbm [shape: f32[8,128], index: 8, kind: output, shape index: {1}]
  %s9 = inlined_call_operand.hbm [shape: f32[8,128], index: 9, kind: output, shape index: {2}]
  %10 = xla_tuple %s7, %s8, %s9
  %s11 = sld [smem:[#allocation0]]
  $region82: #{tpu_custom_call.1} parent=0
    _
  %s13 = ssub.s32 1, %s11
  %s14 = scalar_select 0, %s13, %s11
  $region1: #{tpu_custom_call.1} parent=0
    #allocation5 [shape = 'u8[32768]{0}', space=vmem, size = 0x8000, scoped, tag = 'input window, operand 0, single buffered']
    #allocation6 [shape = 's32[1]{0}', space=sflag, size = 0x4, scoped, tag = 'scoped memory for tpu_custom_call.1']
    #allocation7 [shape = 's32[1]{0}', space=sflag, size = 0x4, scoped, tag = 'scoped memory for tpu_custom_call.1']
    #allocation8 [shape = 'u8[32768]{0}', space=vmem, size = 0x8000, scoped, tag = 'input window, operand 1, single buffered']
    #allocation9 [shape = 's32[1]{0}', space=sflag, size = 0x4, scoped, tag = 'scoped memory for tpu_custom_call.1']
    #allocation10 [shape = 'u8[32768]{0}', space=vmem, size = 0x8000, scoped, tag = 'input window, operand 2, single buffered']
    #allocation11 [shape = 'u8[262144]{0}', space=vmem, size = 0x40000, scoped, tag = 'input window, operand 3, single buffered']
    #allocation12 [shape = 's32[1]{0}', space=sflag, size = 0x4, scoped, tag = 'scoped memory for tpu_custom_call.1']
    #allocation13 [shape = 'u8[32768]{0}', space=vmem, size = 0x8000, scoped, tag = 'input window, operand 5, single buffered']
    #allocation14 [shape = 'u8[4096]{0}', space=vmem, size = 0x1000, scoped, tag = 'output window, operand 0, single buffered']
    #allocation15 [shape = 'u8[4096]{0}', space=vmem, size = 0x1000, scoped, tag = 'output window, operand 1, single buffered']
    #allocation16 [shape = 's32[1]{0}', space=sflag, size = 0x4, scoped, tag = 'scoped memory for tpu_custom_call.1']
    #allocation17 [shape = 'u8[4096]{0}', space=vmem, size = 0x1000, scoped, tag = 'output window, operand 2, single buffered']
    %15 = vsyncpa [#allocation6], 0
    %16 = vsyncpa [#allocation9], 0
    %17 = vsyncpa [#allocation12], 0
    %18 = vsyncpa [#allocation7], 0
    %19 = vsyncpa [#allocation16], 0
    // Predicated region
    $region2: #{tpu_custom_call.1} parent=1 // pred_check
      _
    $region3: #{tpu_custom_call.1} parent=1 // pred_check_branch
      %21 = sbr.rel (0) target = $region5
    $region4: #{tpu_custom_call.1} parent=1 // pred_region
      %s23 = ssub.s32 1024, 1024
      %24 = vsyncadd [#allocation6], %s23
      %s26 = sshll.u32 [#allocation5], 4
      %s27 = int_to_ptr.vmem [resolvable:$true] %s26
      %29 = dma.hbm_to_vmem [thread:$0]  %s0, 1024, %s27, [#allocation6]
    $region5: #{tpu_custom_call.1} parent=1 // pred_fallthru
      _
    // Predicated region
    $region6: #{tpu_custom_call.1} parent=1 // pred_check
      _
    $region7: #{tpu_custom_call.1} parent=1 // pred_check_branch
      %31 = sbr.rel (0) target = $region9
    $region8: #{tpu_custom_call.1} parent=1 // pred_region
      %s33 = ssub.s32 1024, 1024
      %34 = vsyncadd [#allocation9], %s33
      %s36 = sshll.u32 [#allocation8], 4
      %s37 = int_to_ptr.vmem [resolvable:$true] %s36
      %39 = dma.hbm_to_vmem [thread:$0]  %s1, 1024, %s37, [#allocation9]
    $region9: #{tpu_custom_call.1} parent=1 // pred_fallthru
      _
    // Predicated region
    $region10: #{tpu_custom_call.1} parent=1 // pred_check
      _
    $region11: #{tpu_custom_call.1} parent=1 // pred_check_branch
      %41 = sbr.rel (0) target = $region13
    $region12: #{tpu_custom_call.1} parent=1 // pred_region
      %s43 = ssub.s32 1024, 1024
      %44 = vsyncadd [#allocation9], %s43
      %s46 = sshll.u32 [#allocation10], 4
      %s47 = int_to_ptr.vmem [resolvable:$true] %s46
      %49 = dma.hbm_to_vmem [thread:$0]  %s2, 1024, %s47, [#allocation9]
    $region13: #{tpu_custom_call.1} parent=1 // pred_fallthru
      _
    // Predicated region
    $region14: #{tpu_custom_call.1} parent=1 // pred_check
      _
    $region15: #{tpu_custom_call.1} parent=1 // pred_check_branch
      %51 = sbr.rel (0) target = $region17
    $region16: #{tpu_custom_call.1} parent=1 // pred_region
      %s53 = ssub.s32 8192, 8192
      %54 = vsyncadd [#allocation12], %s53
      %s55 = sshll.u32 [#allocation11], 4
      %s56 = int_to_ptr.vmem [resolvable:$true] %s55
      %61 = dma.hbm_to_vmem [thread:$0]  %s3, 8192, %s56, [#allocation12], 64, 64, 4
    $region17: #{tpu_custom_call.1} parent=1 // pred_fallthru
      _
    // Predicated region
    $region18: #{tpu_custom_call.1} parent=1 // pred_check
      _
    $region19: #{tpu_custom_call.1} parent=1 // pred_check_branch
      %63 = sbr.rel (0) target = $region21
    $region20: #{tpu_custom_call.1} parent=1 // pred_region
      _
    $region21: #{tpu_custom_call.1} parent=1 // pred_fallthru
      _
    // Predicated region
    $region22: #{tpu_custom_call.1} parent=1 // pred_check
      _
    $region23: #{tpu_custom_call.1} parent=1 // pred_check_branch
      %65 = sbr.rel (0) target = $region25
    $region24: #{tpu_custom_call.1} parent=1 // pred_region
      %s67 = ssub.s32 1024, 1024
      %68 = vsyncadd [#allocation12], %s67
      %s69 = sshll.u32 [#allocation13], 4
      %s70 = int_to_ptr.vmem [resolvable:$true] %s69
      %75 = dma.hbm_to_vmem [thread:$0]  %s5, 1024, %s70, [#allocation12], 64, 64, 4
    $region25: #{tpu_custom_call.1} parent=1 // pred_fallthru
      _
    // Predicated region
    $region26: #{tpu_custom_call.1} parent=1 // pred_check
      _
    $region27: #{tpu_custom_call.1} parent=1 // pred_check_branch
      %77 = sbr.rel (0) target = $region29
    $region28: #{tpu_custom_call.1} parent=1 // pred_region
      _
    $region29: #{tpu_custom_call.1} parent=1 // pred_fallthru
      _
    // Predicated region
    $region30: #{tpu_custom_call.1} parent=1 // pred_check
      _
    $region31: #{tpu_custom_call.1} parent=1 // pred_check_branch
      %79 = sbr.rel (0) target = $region33
    $region32: #{tpu_custom_call.1} parent=1 // pred_region
      %80 = dma.done [#allocation6], 1024
    $region33: #{tpu_custom_call.1} parent=1 // pred_fallthru
      _
    // Predicated region
    $region34: #{tpu_custom_call.1} parent=1 // pred_check
      _
    $region35: #{tpu_custom_call.1} parent=1 // pred_check_branch
      %82 = sbr.rel (0) target = $region37
    $region36: #{tpu_custom_call.1} parent=1 // pred_region
      %83 = dma.done [#allocation9], 1024
    $region37: #{tpu_custom_call.1} parent=1 // pred_fallthru
      _
    // Predicated region
    $region38: #{tpu_custom_call.1} parent=1 // pred_check
      _
    $region39: #{tpu_custom_call.1} parent=1 // pred_check_branch
      %85 = sbr.rel (0) target = $region41
    $region40: #{tpu_custom_call.1} parent=1 // pred_region
      %86 = dma.done [#allocation9], 1024
    $region41: #{tpu_custom_call.1} parent=1 // pred_fallthru
      _
    // Predicated region
    $region42: #{tpu_custom_call.1} parent=1 // pred_check
      _
    $region43: #{tpu_custom_call.1} parent=1 // pred_check_branch
      %88 = sbr.rel (0) target = $region45
    $region44: #{tpu_custom_call.1} parent=1 // pred_region
      %89 = dma.done [#allocation12], 8192
    $region45: #{tpu_custom_call.1} parent=1 // pred_fallthru
      _
    // Predicated region
    $region46: #{tpu_custom_call.1} parent=1 // pred_check
      _
    $region47: #{tpu_custom_call.1} parent=1 // pred_check_branch
      %91 = sbr.rel (0) target = $region49
    $region48: #{tpu_custom_call.1} parent=1 // pred_region
      %92 = dma.done [#allocation12], 1024
    $region49: #{tpu_custom_call.1} parent=1 // pred_fallthru
      _
    %p94 = scmp.eq.s32.totalorder 0, 0
    // Predicated region
    $region50: #{tpu_custom_call.1} parent=1 // pred_check
      %p95 = pneg %p94
    $region51: #{tpu_custom_call.1} parent=1 // pred_check_branch
      %97 = sbr.rel (%p95) target = $region53
    $region52: #{tpu_custom_call.1} parent=1 // pred_region
      %v98 = vld [vmem:[%s4] sm:$0x1]
      %v100 = vlaneseq
      %v101 = vshrl.u32 %v100, 7
      %v102 = vsub.s32 0, %v101
      %v103 = vrot.slane %v98, %v102
      %105 = vst [vmem:[#allocation2] sm:$0xff] %v103
      %106 = vst [vmem:[#allocation3] sm:$0xff] %v103
      %107 = vst [vmem:[#allocation4] sm:$0xff] %v103
    $region53: #{tpu_custom_call.1} parent=1 // pred_fallthru
      _
    %v108 = vld [vmem:[#allocation11] sm:$0xf]
    %v109 = vld [vmem:[#allocation11 + $0x4] sm:$0xf]
    %v110 = vld [vmem:[#allocation11 + $0x8] sm:$0xf]
    %v111 = vld [vmem:[#allocation11 + $0xc] sm:$0xf]
    %v112 = vld [vmem:[#allocation11 + $0x10] sm:$0xf]
    %v113 = vld [vmem:[#allocation11 + $0x14] sm:$0xf]
    %v114 = vld [vmem:[#allocation11 + $0x18] sm:$0xf]
    %v115 = vld [vmem:[#allocation11 + $0x1c] sm:$0xf]
    %v116 = vld [vmem:[#allocation11 + $0x20] sm:$0xf]
    %v117 = vld [vmem:[#allocation11 + $0x24] sm:$0xf]
    %v118 = vld [vmem:[#allocation11 + $0x28] sm:$0xf]
    %v119 = vld [vmem:[#allocation11 + $0x2c] sm:$0xf]
    %v120 = vld [vmem:[#allocation11 + $0x30] sm:$0xf]
    %v121 = vld [vmem:[#allocation11 + $0x34] sm:$0xf]
    %v122 = vld [vmem:[#allocation11 + $0x38] sm:$0xf]
    %v123 = vld [vmem:[#allocation11 + $0x3c] sm:$0xf]
    %v124 = vld [vmem:[#allocation11 + $0x40] sm:$0xf]
    %v125 = vld [vmem:[#allocation11 + $0x44] sm:$0xf]
    %v126 = vld [vmem:[#allocation11 + $0x48] sm:$0xf]
    %v127 = vld [vmem:[#allocation11 + $0x4c] sm:$0xf]
    %v128 = vld [vmem:[#allocation11 + $0x50] sm:$0xf]
    %v129 = vld [vmem:[#allocation11 + $0x54] sm:$0xf]
    %v130 = vld [vmem:[#allocation11 + $0x58] sm:$0xf]
    %v131 = vld [vmem:[#allocation11 + $0x5c] sm:$0xf]
    %v132 = vld [vmem:[#allocation11 + $0x60] sm:$0xf]
    %v133 = vld [vmem:[#allocation11 + $0x64] sm:$0xf]
    %v134 = vld [vmem:[#allocation11 + $0x68] sm:$0xf]
    %v135 = vld [vmem:[#allocation11 + $0x6c] sm:$0xf]
    %v136 = vld [vmem:[#allocation11 + $0x70] sm:$0xf]
    %v137 = vld [vmem:[#allocation11 + $0x74] sm:$0xf]
    %v138 = vld [vmem:[#allocation11 + $0x78] sm:$0xf]
    %v139 = vld [vmem:[#allocation11 + $0x7c] sm:$0xf]
    %v140 = vld [vmem:[#allocation11 + $0x80] sm:$0xf]
    %v141 = vld [vmem:[#allocation11 + $0x84] sm:$0xf]
    %v142 = vld [vmem:[#allocation11 + $0x88] sm:$0xf]
    %v143 = vld [vmem:[#allocation11 + $0x8c] sm:$0xf]
    %v144 = vld [vmem:[#allocation11 + $0x90] sm:$0xf]
    %v145 = vld [vmem:[#allocation11 + $0x94] sm:$0xf]
    %v146 = vld [vmem:[#allocation11 + $0x98] sm:$0xf]
    %v147 = vld [vmem:[#allocation11 + $0x9c] sm:$0xf]
    %v148 = vld [vmem:[#allocation11 + $0xa0] sm:$0xf]
    %v149 = vld [vmem:[#allocation11 + $0xa4] sm:$0xf]
    %v150 = vld [vmem:[#allocation11 + $0xa8] sm:$0xf]
    %v151 = vld [vmem:[#allocation11 + $0xac] sm:$0xf]
    %v152 = vld [vmem:[#allocation11 + $0xb0] sm:$0xf]
    %v153 = vld [vmem:[#allocation11 + $0xb4] sm:$0xf]
    %v154 = vld [vmem:[#allocation11 + $0xb8] sm:$0xf]
    %v155 = vld [vmem:[#allocation11 + $0xbc] sm:$0xf]
    %v156 = vld [vmem:[#allocation11 + $0xc0] sm:$0xf]
    %v157 = vld [vmem:[#allocation11 + $0xc4] sm:$0xf]
    %v158 = vld [vmem:[#allocation11 + $0xc8] sm:$0xf]
    %v159 = vld [vmem:[#allocation11 + $0xcc] sm:$0xf]
    %v160 = vld [vmem:[#allocation11 + $0xd0] sm:$0xf]
    %v161 = vld [vmem:[#allocation11 + $0xd4] sm:$0xf]
    %v162 = vld [vmem:[#allocation11 + $0xd8] sm:$0xf]
    %v163 = vld [vmem:[#allocation11 + $0xdc] sm:$0xf]
    %v164 = vld [vmem:[#allocation11 + $0xe0] sm:$0xf]
    %v165 = vld [vmem:[#allocation11 + $0xe4] sm:$0xf]
    %v166 = vld [vmem:[#allocation11 + $0xe8] sm:$0xf]
    %v167 = vld [vmem:[#allocation11 + $0xec] sm:$0xf]
    %v168 = vld [vmem:[#allocation11 + $0xf0] sm:$0xf]
    %v169 = vld [vmem:[#allocation11 + $0xf4] sm:$0xf]
    %v170 = vld [vmem:[#allocation11 + $0xf8] sm:$0xf]
    %v171 = vld [vmem:[#allocation11 + $0xfc] sm:$0xf]
    %v172 = vld [vmem:[#allocation11 + $0x100] sm:$0xf]
    %v173 = vld [vmem:[#allocation11 + $0x104] sm:$0xf]
    %v174 = vld [vmem:[#allocation11 + $0x108] sm:$0xf]
    %v175 = vld [vmem:[#allocation11 + $0x10c] sm:$0xf]
    %v176 = vld [vmem:[#allocation11 + $0x110] sm:$0xf]
    %v177 = vld [vmem:[#allocation11 + $0x114] sm:$0xf]
    %v178 = vld [vmem:[#allocation11 + $0x118] sm:$0xf]
    %v179 = vld [vmem:[#allocation11 + $0x11c] sm:$0xf]
    %v180 = vld [vmem:[#allocation11 + $0x120] sm:$0xf]
    %v181 = vld [vmem:[#allocation11 + $0x124] sm:$0xf]
    %v182 = vld [vmem:[#allocation11 + $0x128] sm:$0xf]
    %v183 = vld [vmem:[#allocation11 + $0x12c] sm:$0xf]
    %v184 = vld [vmem:[#allocation11 + $0x130] sm:$0xf]
    %v185 = vld [vmem:[#allocation11 + $0x134] sm:$0xf]
    %v186 = vld [vmem:[#allocation11 + $0x138] sm:$0xf]
    %v187 = vld [vmem:[#allocation11 + $0x13c] sm:$0xf]
    %v188 = vld [vmem:[#allocation11 + $0x140] sm:$0xf]
    %v189 = vld [vmem:[#allocation11 + $0x144] sm:$0xf]
    %v190 = vld [vmem:[#allocation11 + $0x148] sm:$0xf]
    %v191 = vld [vmem:[#allocation11 + $0x14c] sm:$0xf]
    %v192 = vld [vmem:[#allocation11 + $0x150] sm:$0xf]
    %v193 = vld [vmem:[#allocation11 + $0x154] sm:$0xf]
    %v194 = vld [vmem:[#allocation11 + $0x158] sm:$0xf]
    %v195 = vld [vmem:[#allocation11 + $0x15c] sm:$0xf]
    %v196 = vld [vmem:[#allocation11 + $0x160] sm:$0xf]
    %v197 = vld [vmem:[#allocation11 + $0x164] sm:$0xf]
    %v198 = vld [vmem:[#allocation11 + $0x168] sm:$0xf]
    %v199 = vld [vmem:[#allocation11 + $0x16c] sm:$0xf]
    %v200 = vld [vmem:[#allocation11 + $0x170] sm:$0xf]
    %v201 = vld [vmem:[#allocation11 + $0x174] sm:$0xf]
    %v202 = vld [vmem:[#allocation11 + $0x178] sm:$0xf]
    %v203 = vld [vmem:[#allocation11 + $0x17c] sm:$0xf]
    %v204 = vld [vmem:[#allocation11 + $0x180] sm:$0xf]
    %v205 = vld [vmem:[#allocation11 + $0x184] sm:$0xf]
    %v206 = vld [vmem:[#allocation11 + $0x188] sm:$0xf]
    %v207 = vld [vmem:[#allocation11 + $0x18c] sm:$0xf]
    %v208 = vld [vmem:[#allocation11 + $0x190] sm:$0xf]
    %v209 = vld [vmem:[#allocation11 + $0x194] sm:$0xf]
    %v210 = vld [vmem:[#allocation11 + $0x198] sm:$0xf]
    %v211 = vld [vmem:[#allocation11 + $0x19c] sm:$0xf]
    %v212 = vld [vmem:[#allocation11 + $0x1a0] sm:$0xf]
    %v213 = vld [vmem:[#allocation11 + $0x1a4] sm:$0xf]
    %v214 = vld [vmem:[#allocation11 + $0x1a8] sm:$0xf]
    %v215 = vld [vmem:[#allocation11 + $0x1ac] sm:$0xf]
    %v216 = vld [vmem:[#allocation11 + $0x1b0] sm:$0xf]
    %v217 = vld [vmem:[#allocation11 + $0x1b4] sm:$0xf]
    %v218 = vld [vmem:[#allocation11 + $0x1b8] sm:$0xf]
    %v219 = vld [vmem:[#allocation11 + $0x1bc] sm:$0xf]
    %v220 = vld [vmem:[#allocation11 + $0x1c0] sm:$0xf]
    %v221 = vld [vmem:[#allocation11 + $0x1c4] sm:$0xf]
    %v222 = vld [vmem:[#allocation11 + $0x1c8] sm:$0xf]
    %v223 = vld [vmem:[#allocation11 + $0x1cc] sm:$0xf]
    %v224 = vld [vmem:[#allocation11 + $0x1d0] sm:$0xf]
    %v225 = vld [vmem:[#allocation11 + $0x1d4] sm:$0xf]
    %v226 = vld [vmem:[#allocation11 + $0x1d8] sm:$0xf]
    %v227 = vld [vmem:[#allocation11 + $0x1dc] sm:$0xf]
    %v228 = vld [vmem:[#allocation11 + $0x1e0] sm:$0xf]
    %v229 = vld [vmem:[#allocation11 + $0x1e4] sm:$0xf]
    %v230 = vld [vmem:[#allocation11 + $0x1e8] sm:$0xf]
    %v231 = vld [vmem:[#allocation11 + $0x1ec] sm:$0xf]
    %v232 = vld [vmem:[#allocation11 + $0x1f0] sm:$0xf]
    %v233 = vld [vmem:[#allocation11 + $0x1f4] sm:$0xf]
    %v234 = vld [vmem:[#allocation11 + $0x1f8] sm:$0xf]
    %v235 = vld [vmem:[#allocation11 + $0x1fc] sm:$0xf]
    %v236 = vld [vmem:[#allocation2] sm:$0xff]
    %v237 = vld [vmem:[#allocation5] sm:$0xff]
    %v238 = vld [vmem:[#allocation5 + $0x8] sm:$0xff]
    %v239 = vld [vmem:[#allocation5 + $0x10] sm:$0xff]
    %v240 = vld [vmem:[#allocation5 + $0x18] sm:$0xff]
    %v241 = vld [vmem:[#allocation5 + $0x20] sm:$0xff]
    %v242 = vld [vmem:[#allocation5 + $0x28] sm:$0xff]
    %v243 = vld [vmem:[#allocation5 + $0x30] sm:$0xff]
    %v244 = vld [vmem:[#allocation5 + $0x38] sm:$0xff]
    %v245 = vpack.c.bf16 %v237, %v237
    %v246 = vpack.c.bf16 %v238, %v238
    %v247 = vpack.c.bf16 %v239, %v239
    %v248 = vpack.c.bf16 %v240, %v240
    %v249 = vpack.c.bf16 %v241, %v241
    %v250 = vpack.c.bf16 %v242, %v242
    %v251 = vpack.c.bf16 %v243, %v243
    %v252 = vpack.c.bf16 %v244, %v244
    %v381 = vunpack.c.l.b16 %v108
    %v382 = vunpack.c.l.b16 %v109
    %v383 = vunpack.c.l.b16 %v110
    %v384 = vunpack.c.l.b16 %v111
    %v385 = vunpack.c.l.b16 %v112
    %v386 = vunpack.c.l.b16 %v113
    %v387 = vunpack.c.l.b16 %v114
    %v388 = vunpack.c.l.b16 %v115
    %v389 = vunpack.c.l.b16 %v116
    %v390 = vunpack.c.l.b16 %v117
    %v391 = vunpack.c.l.b16 %v118
    %v392 = vunpack.c.l.b16 %v119
    %v393 = vunpack.c.l.b16 %v120
    %v394 = vunpack.c.l.b16 %v121
    %v395 = vunpack.c.l.b16 %v122
    %v396 = vunpack.c.l.b16 %v123
    %v397 = vunpack.c.l.b16 %v124
    %v398 = vunpack.c.l.b16 %v125
    %v399 = vunpack.c.l.b16 %v126
    %v400 = vunpack.c.l.b16 %v127
    %v401 = vunpack.c.l.b16 %v128
    %v402 = vunpack.c.l.b16 %v129
    %v403 = vunpack.c.l.b16 %v130
    %v404 = vunpack.c.l.b16 %v131
    %v405 = vunpack.c.l.b16 %v132
    %v406 = vunpack.c.l.b16 %v133
    %v407 = vunpack.c.l.b16 %v134
    %v408 = vunpack.c.l.b16 %v135
    %v409 = vunpack.c.l.b16 %v136
    %v410 = vunpack.c.l.b16 %v137
    %v411 = vunpack.c.l.b16 %v138
    %v412 = vunpack.c.l.b16 %v139
    %v413 = vunpack.c.l.b16 %v140
    %v414 = vunpack.c.l.b16 %v141
    %v415 = vunpack.c.l.b16 %v142
    %v416 = vunpack.c.l.b16 %v143
    %v417 = vunpack.c.l.b16 %v144
    %v418 = vunpack.c.l.b16 %v145
    %v419 = vunpack.c.l.b16 %v146
    %v420 = vunpack.c.l.b16 %v147
    %v421 = vunpack.c.l.b16 %v148
    %v422 = vunpack.c.l.b16 %v149
    %v423 = vunpack.c.l.b16 %v150
    %v424 = vunpack.c.l.b16 %v151
    %v425 = vunpack.c.l.b16 %v152
    %v426 = vunpack.c.l.b16 %v153
    %v427 = vunpack.c.l.b16 %v154
    %v428 = vunpack.c.l.b16 %v155
    %v429 = vunpack.c.l.b16 %v156
    %v430 = vunpack.c.l.b16 %v157
    %v431 = vunpack.c.l.b16 %v158
    %v432 = vunpack.c.l.b16 %v159
    %v433 = vunpack.c.l.b16 %v160
    %v434 = vunpack.c.l.b16 %v161
    %v435 = vunpack.c.l.b16 %v162
    %v436 = vunpack.c.l.b16 %v163
    %v437 = vunpack.c.l.b16 %v164
    %v438 = vunpack.c.l.b16 %v165
    %v439 = vunpack.c.l.b16 %v166
    %v440 = vunpack.c.l.b16 %v167
    %v441 = vunpack.c.l.b16 %v168
    %v442 = vunpack.c.l.b16 %v169
    %v443 = vunpack.c.l.b16 %v170
    %v444 = vunpack.c.l.b16 %v171
    %v445 = vunpack.c.l.b16 %v172
    %v446 = vunpack.c.l.b16 %v173
    %v447 = vunpack.c.l.b16 %v174
    %v448 = vunpack.c.l.b16 %v175
    %v449 = vunpack.c.l.b16 %v176
    %v450 = vunpack.c.l.b16 %v177
    %v451 = vunpack.c.l.b16 %v178
    %v452 = vunpack.c.l.b16 %v179
    %v453 = vunpack.c.l.b16 %v180
    %v454 = vunpack.c.l.b16 %v181
    %v455 = vunpack.c.l.b16 %v182
    %v456 = vunpack.c.l.b16 %v183
    %v457 = vunpack.c.l.b16 %v184
    %v458 = vunpack.c.l.b16 %v185
    %v459 = vunpack.c.l.b16 %v186
    %v460 = vunpack.c.l.b16 %v187
    %v461 = vunpack.c.l.b16 %v188
    %v462 = vunpack.c.l.b16 %v189
    %v463 = vunpack.c.l.b16 %v190
    %v464 = vunpack.c.l.b16 %v191
    %v465 = vunpack.c.l.b16 %v192
    %v466 = vunpack.c.l.b16 %v193
    %v467 = vunpack.c.l.b16 %v194
    %v468 = vunpack.c.l.b16 %v195
    %v469 = vunpack.c.l.b16 %v196
    %v470 = vunpack.c.l.b16 %v197
    %v471 = vunpack.c.l.b16 %v198
    %v472 = vunpack.c.l.b16 %v199
    %v473 = vunpack.c.l.b16 %v200
    %v474 = vunpack.c.l.b16 %v201
    %v475 = vunpack.c.l.b16 %v202
    %v476 = vunpack.c.l.b16 %v203
    %v477 = vunpack.c.l.b16 %v204
    %v478 = vunpack.c.l.b16 %v205
    %v479 = vunpack.c.l.b16 %v206
    %v480 = vunpack.c.l.b16 %v207
    %v481 = vunpack.c.l.b16 %v208
    %v482 = vunpack.c.l.b16 %v209
    %v483 = vunpack.c.l.b16 %v210
    %v484 = vunpack.c.l.b16 %v211
    %v485 = vunpack.c.l.b16 %v212
    %v486 = vunpack.c.l.b16 %v213
    %v487 = vunpack.c.l.b16 %v214
    %v488 = vunpack.c.l.b16 %v215
    %v489 = vunpack.c.l.b16 %v216
    %v490 = vunpack.c.l.b16 %v217
    %v491 = vunpack.c.l.b16 %v218
    %v492 = vunpack.c.l.b16 %v219
    %v493 = vunpack.c.l.b16 %v220
    %v494 = vunpack.c.l.b16 %v221
    %v495 = vunpack.c.l.b16 %v222
    %v496 = vunpack.c.l.b16 %v223
    %v497 = vunpack.c.l.b16 %v224
    %v498 = vunpack.c.l.b16 %v225
    %v499 = vunpack.c.l.b16 %v226
    %v500 = vunpack.c.l.b16 %v227
    %v501 = vunpack.c.l.b16 %v228
    %v502 = vunpack.c.l.b16 %v229
    %v503 = vunpack.c.l.b16 %v230
    %v504 = vunpack.c.l.b16 %v231
    %v505 = vunpack.c.l.b16 %v232
    %v506 = vunpack.c.l.b16 %v233
    %v507 = vunpack.c.l.b16 %v234
    %v508 = vunpack.c.l.b16 %v235
    %v509 = vpack.c.b16 %v382, %v381
    %v510 = vpack.c.b16 %v384, %v383
    %v511 = vpack.c.b16 %v386, %v385
    %v512 = vpack.c.b16 %v388, %v387
    %v513 = vpack.c.b16 %v390, %v389
    %v514 = vpack.c.b16 %v392, %v391
    %v515 = vpack.c.b16 %v394, %v393
    %v516 = vpack.c.b16 %v396, %v395
    %v517 = vpack.c.b16 %v398, %v397
    %v518 = vpack.c.b16 %v400, %v399
    %v519 = vpack.c.b16 %v402, %v401
    %v520 = vpack.c.b16 %v404, %v403
    %v521 = vpack.c.b16 %v406, %v405
    %v522 = vpack.c.b16 %v408, %v407
    %v523 = vpack.c.b16 %v410, %v409
    %v524 = vpack.c.b16 %v412, %v411
    %v525 = vpack.c.b16 %v414, %v413
    %v526 = vpack.c.b16 %v416, %v415
    %v527 = vpack.c.b16 %v418, %v417
    %v528 = vpack.c.b16 %v420, %v419
    %v529 = vpack.c.b16 %v422, %v421
    %v530 = vpack.c.b16 %v424, %v423
    %v531 = vpack.c.b16 %v426, %v425
    %v532 = vpack.c.b16 %v428, %v427
    %v533 = vpack.c.b16 %v430, %v429
    %v534 = vpack.c.b16 %v432, %v431
    %v535 = vpack.c.b16 %v434, %v433
    %v536 = vpack.c.b16 %v436, %v435
    %v537 = vpack.c.b16 %v438, %v437
    %v538 = vpack.c.b16 %v440, %v439
    %v539 = vpack.c.b16 %v442, %v441
    %v540 = vpack.c.b16 %v444, %v443
    %v541 = vpack.c.b16 %v446, %v445
    %v542 = vpack.c.b16 %v448, %v447
    %v543 = vpack.c.b16 %v450, %v449
    %v544 = vpack.c.b16 %v452, %v451
    %v545 = vpack.c.b16 %v454, %v453
    %v546 = vpack.c.b16 %v456, %v455
    %v547 = vpack.c.b16 %v458, %v457
    %v548 = vpack.c.b16 %v460, %v459
    %v549 = vpack.c.b16 %v462, %v461
    %v550 = vpack.c.b16 %v464, %v463
    %v551 = vpack.c.b16 %v466, %v465
    %v552 = vpack.c.b16 %v468, %v467
    %v553 = vpack.c.b16 %v470, %v469
    %v554 = vpack.c.b16 %v472, %v471
    %v555 = vpack.c.b16 %v474, %v473
    %v556 = vpack.c.b16 %v476, %v475
    %v557 = vpack.c.b16 %v478, %v477
    %v558 = vpack.c.b16 %v480, %v479
    %v559 = vpack.c.b16 %v482, %v481
    %v560 = vpack.c.b16 %v484, %v483
    %v561 = vpack.c.b16 %v486, %v485
    %v562 = vpack.c.b16 %v488, %v487
    %v563 = vpack.c.b16 %v490, %v489
    %v564 = vpack.c.b16 %v492, %v491
    %v565 = vpack.c.b16 %v494, %v493
    %v566 = vpack.c.b16 %v496, %v495
    %v567 = vpack.c.b16 %v498, %v497
    %v568 = vpack.c.b16 %v500, %v499
    %v569 = vpack.c.b16 %v502, %v501
    %v570 = vpack.c.b16 %v504, %v503
    %v571 = vpack.c.b16 %v506, %v505
    %v572 = vpack.c.b16 %v508, %v507
    %637 = vmatprep.subr.bf16.mxu0 0
    %638 = vmatpush1.bf16.msra.mxu0 %v509
    %639 = vmatprep.subr.bf16.mxu0 0
    %640 = vmatpush1.bf16.msra.mxu0 %v510
    %641 = vmatprep.subr.bf16.mxu0 0
    %642 = vmatpush1.bf16.msra.mxu0 %v511
    %643 = vmatprep.subr.bf16.mxu0 0
    %644 = vmatpush1.bf16.msra.mxu0 %v512
    %645 = vmatprep.subr.bf16.mxu0 0
    %646 = vmatpush1.bf16.msra.mxu0 %v513
    %647 = vmatprep.subr.bf16.mxu0 0
    %648 = vmatpush1.bf16.msra.mxu0 %v514
    %649 = vmatprep.subr.bf16.mxu0 0
    %650 = vmatpush1.bf16.msra.mxu0 %v515
    %651 = vmatprep.subr.bf16.mxu0 0
    %652 = vmatpush1.bf16.msra.mxu0 %v516
    %653 = vmatprep.subr.bf16.mxu0 0
    %654 = vmatpush1.bf16.msra.mxu0 %v517
    %655 = vmatprep.subr.bf16.mxu0 0
    %656 = vmatpush1.bf16.msra.mxu0 %v518
    %657 = vmatprep.subr.bf16.mxu0 0
    %658 = vmatpush1.bf16.msra.mxu0 %v519
    %659 = vmatprep.subr.bf16.mxu0 0
    %660 = vmatpush1.bf16.msra.mxu0 %v520
    %661 = vmatprep.subr.bf16.mxu0 0
    %662 = vmatpush1.bf16.msra.mxu0 %v521
    %663 = vmatprep.subr.bf16.mxu0 0
    %664 = vmatpush1.bf16.msra.mxu0 %v522
    %665 = vmatprep.subr.bf16.mxu0 0
    %666 = vmatpush1.bf16.msra.mxu0 %v523
    %667 = vmatprep.subr.bf16.mxu0 0
    %668 = vmatpush1.bf16.msra.mxu0 %v524
    %669 = vmatprep.mubr.bf16.mxu0 %v246
    %670 = vmatmul.mubr.bf16.gmra.mrb[0].mxu0 %v245
    %v671 = vpop.f32.mrb[0].mxu0
    %v672 = vadd.f32 0.0, %v671
    %v673 = vpop.f32.mrb[0].mxu0
    %v674 = vpop.f32.mrb[0].mxu0
    %v675 = vpop.f32.mrb[0].mxu0
    %676 = vdwg.mxu0
    %677 = vmatprep.subr.bf16.mxu0 0
    %678 = vmatpush1.bf16.msra.mxu0 %v525
    %679 = vmatprep.subr.bf16.mxu0 0
    %680 = vmatpush1.bf16.msra.mxu0 %v526
    %681 = vmatprep.subr.bf16.mxu0 0
    %682 = vmatpush1.bf16.msra.mxu0 %v527
    %683 = vmatprep.subr.bf16.mxu0 0
    %684 = vmatpush1.bf16.msra.mxu0 %v528
    %685 = vmatprep.subr.bf16.mxu0 0
    %686 = vmatpush1.bf16.msra.mxu0 %v529
    %687 = vmatprep.subr.bf16.mxu0 0
    %688 = vmatpush1.bf16.msra.mxu0 %v530
    %689 = vmatprep.subr.bf16.mxu0 0
    %690 = vmatpush1.bf16.msra.mxu0 %v531
    %691 = vmatprep.subr.bf16.mxu0 0
    %692 = vmatpush1.bf16.msra.mxu0 %v532
    %693 = vmatprep.subr.bf16.mxu0 0
    %694 = vmatpush1.bf16.msra.mxu0 %v533
    %695 = vmatprep.subr.bf16.mxu0 0
    %696 = vmatpush1.bf16.msra.mxu0 %v534
    %697 = vmatprep.subr.bf16.mxu0 0
    %698 = vmatpush1.bf16.msra.mxu0 %v535
    %699 = vmatprep.subr.bf16.mxu0 0
    %700 = vmatpush1.bf16.msra.mxu0 %v536
    %701 = vmatprep.subr.bf16.mxu0 0
    %702 = vmatpush1.bf16.msra.mxu0 %v537
    %703 = vmatprep.subr.bf16.mxu0 0
    %704 = vmatpush1.bf16.msra.mxu0 %v538
    %705 = vmatprep.subr.bf16.mxu0 0
    %706 = vmatpush1.bf16.msra.mxu0 %v539
    %707 = vmatprep.subr.bf16.mxu0 0
    %708 = vmatpush1.bf16.msra.mxu0 %v540
    %709 = vmatprep.mubr.bf16.mxu0 %v248
    %710 = vmatmul.mubr.bf16.gmra.mrb[0].mxu0 %v247
    %v711 = vpop.f32.mrb[0].mxu0
    %v712 = vadd.f32 %v672, %v711
    %v713 = vpop.f32.mrb[0].mxu0
    %v714 = vpop.f32.mrb[0].mxu0
    %v715 = vpop.f32.mrb[0].mxu0
    %716 = vdwg.mxu0
    %717 = vmatprep.subr.bf16.mxu0 0
    %718 = vmatpush1.bf16.msra.mxu0 %v541
    %719 = vmatprep.subr.bf16.mxu0 0
    %720 = vmatpush1.bf16.msra.mxu0 %v542
    %721 = vmatprep.subr.bf16.mxu0 0
    %722 = vmatpush1.bf16.msra.mxu0 %v543
    %723 = vmatprep.subr.bf16.mxu0 0
    %724 = vmatpush1.bf16.msra.mxu0 %v544
    %725 = vmatprep.subr.bf16.mxu0 0
    %726 = vmatpush1.bf16.msra.mxu0 %v545
    %727 = vmatprep.subr.bf16.mxu0 0
    %728 = vmatpush1.bf16.msra.mxu0 %v546
    %729 = vmatprep.subr.bf16.mxu0 0
    %730 = vmatpush1.bf16.msra.mxu0 %v547
    %731 = vmatprep.subr.bf16.mxu0 0
    %732 = vmatpush1.bf16.msra.mxu0 %v548
    %733 = vmatprep.subr.bf16.mxu0 0
    %734 = vmatpush1.bf16.msra.mxu0 %v549
    %735 = vmatprep.subr.bf16.mxu0 0
    %736 = vmatpush1.bf16.msra.mxu0 %v550
    %737 = vmatprep.subr.bf16.mxu0 0
    %738 = vmatpush1.bf16.msra.mxu0 %v551
    %739 = vmatprep.subr.bf16.mxu0 0
    %740 = vmatpush1.bf16.msra.mxu0 %v552
    %741 = vmatprep.subr.bf16.mxu0 0
    %742 = vmatpush1.bf16.msra.mxu0 %v553
    %743 = vmatprep.subr.bf16.mxu0 0
    %744 = vmatpush1.bf16.msra.mxu0 %v554
    %745 = vmatprep.subr.bf16.mxu0 0
    %746 = vmatpush1.bf16.msra.mxu0 %v555
    %747 = vmatprep.subr.bf16.mxu0 0
    %748 = vmatpush1.bf16.msra.mxu0 %v556
    %749 = vmatprep.mubr.bf16.mxu0 %v250
    %750 = vmatmul.mubr.bf16.gmra.mrb[0].mxu0 %v249
    %v751 = vpop.f32.mrb[0].mxu0
    %v752 = vadd.f32 %v712, %v751
    %v753 = vpop.f32.mrb[0].mxu0
    %v754 = vpop.f32.mrb[0].mxu0
    %v755 = vpop.f32.mrb[0].mxu0
    %756 = vdwg.mxu0
    %757 = vmatprep.subr.bf16.mxu0 0
    %758 = vmatpush1.bf16.msra.mxu0 %v557
    %759 = vmatprep.subr.bf16.mxu0 0
    %760 = vmatpush1.bf16.msra.mxu0 %v558
    %761 = vmatprep.subr.bf16.mxu0 0
    %762 = vmatpush1.bf16.msra.mxu0 %v559
    %763 = vmatprep.subr.bf16.mxu0 0
    %764 = vmatpush1.bf16.msra.mxu0 %v560
    %765 = vmatprep.subr.bf16.mxu0 0
    %766 = vmatpush1.bf16.msra.mxu0 %v561
    %767 = vmatprep.subr.bf16.mxu0 0
    %768 = vmatpush1.bf16.msra.mxu0 %v562
    %769 = vmatprep.subr.bf16.mxu0 0
    %770 = vmatpush1.bf16.msra.mxu0 %v563
    %771 = vmatprep.subr.bf16.mxu0 0
    %772 = vmatpush1.bf16.msra.mxu0 %v564
    %773 = vmatprep.subr.bf16.mxu0 0
    %774 = vmatpush1.bf16.msra.mxu0 %v565
    %775 = vmatprep.subr.bf16.mxu0 0
    %776 = vmatpush1.bf16.msra.mxu0 %v566
    %777 = vmatprep.subr.bf16.mxu0 0
    %778 = vmatpush1.bf16.msra.mxu0 %v567
    %779 = vmatprep.subr.bf16.mxu0 0
    %780 = vmatpush1.bf16.msra.mxu0 %v568
    %781 = vmatprep.subr.bf16.mxu0 0
    %782 = vmatpush1.bf16.msra.mxu0 %v569
    %783 = vmatprep.subr.bf16.mxu0 0
    %784 = vmatpush1.bf16.msra.mxu0 %v570
    %785 = vmatprep.subr.bf16.mxu0 0
    %786 = vmatpush1.bf16.msra.mxu0 %v571
    %787 = vmatprep.subr.bf16.mxu0 0
    %788 = vmatpush1.bf16.msra.mxu0 %v572
    %789 = vmatprep.mubr.bf16.mxu0 %v252
    %790 = vmatmul.mubr.bf16.gmra.mrb[0].mxu0 %v251
    %v791 = vpop.f32.mrb[0].mxu0
    %v792 = vadd.f32 %v752, %v791
    %v793 = vpop.f32.mrb[0].mxu0
    %v794 = vpop.f32.mrb[0].mxu0
    %v795 = vpop.f32.mrb[0].mxu0
    %796 = vdwg.mxu0
    %v797 = vadd.f32 %v236, %v792
    %798 = vst [vmem:[#allocation2] sm:$0xff] %v797
    %v799 = vld [vmem:[#allocation3] sm:$0xff]
    %v800 = vld [vmem:[#allocation8] sm:$0xff]
    %v801 = vld [vmem:[#allocation8 + $0x8] sm:$0xff]
    %v802 = vld [vmem:[#allocation8 + $0x10] sm:$0xff]
    %v803 = vld [vmem:[#allocation8 + $0x18] sm:$0xff]
    %v804 = vld [vmem:[#allocation8 + $0x20] sm:$0xff]
    %v805 = vld [vmem:[#allocation8 + $0x28] sm:$0xff]
    %v806 = vld [vmem:[#allocation8 + $0x30] sm:$0xff]
    %v807 = vld [vmem:[#allocation8 + $0x38] sm:$0xff]
    %v808 = vpack.c.bf16 %v800, %v800
    %v809 = vpack.c.bf16 %v801, %v801
    %v810 = vpack.c.bf16 %v802, %v802
    %v811 = vpack.c.bf16 %v803, %v803
    %v812 = vpack.c.bf16 %v804, %v804
    %v813 = vpack.c.bf16 %v805, %v805
    %v814 = vpack.c.bf16 %v806, %v806
    %v815 = vpack.c.bf16 %v807, %v807
    %816 = vmatprep.subr.bf16.mxu0 0
    %817 = vmatpush1.bf16.msra.mxu0 %v509
    %818 = vmatprep.subr.bf16.mxu0 0
    %819 = vmatpush1.bf16.msra.mxu0 %v510
    %820 = vmatprep.subr.bf16.mxu0 0
    %821 = vmatpush1.bf16.msra.mxu0 %v511
    %822 = vmatprep.subr.bf16.mxu0 0
    %823 = vmatpush1.bf16.msra.mxu0 %v512
    %824 = vmatprep.subr.bf16.mxu0 0
    %825 = vmatpush1.bf16.msra.mxu0 %v513
    %826 = vmatprep.subr.bf16.mxu0 0
    %827 = vmatpush1.bf16.msra.mxu0 %v514
    %828 = vmatprep.subr.bf16.mxu0 0
    %829 = vmatpush1.bf16.msra.mxu0 %v515
    %830 = vmatprep.subr.bf16.mxu0 0
    %831 = vmatpush1.bf16.msra.mxu0 %v516
    %832 = vmatprep.subr.bf16.mxu0 0
    %833 = vmatpush1.bf16.msra.mxu0 %v517
    %834 = vmatprep.subr.bf16.mxu0 0
    %835 = vmatpush1.bf16.msra.mxu0 %v518
    %836 = vmatprep.subr.bf16.mxu0 0
    %837 = vmatpush1.bf16.msra.mxu0 %v519
    %838 = vmatprep.subr.bf16.mxu0 0
    %839 = vmatpush1.bf16.msra.mxu0 %v520
    %840 = vmatprep.subr.bf16.mxu0 0
    %841 = vmatpush1.bf16.msra.mxu0 %v521
    %842 = vmatprep.subr.bf16.mxu0 0
    %843 = vmatpush1.bf16.msra.mxu0 %v522
    %844 = vmatprep.subr.bf16.mxu0 0
    %845 = vmatpush1.bf16.msra.mxu0 %v523
    %846 = vmatprep.subr.bf16.mxu0 0
    %847 = vmatpush1.bf16.msra.mxu0 %v524
    %848 = vmatprep.mubr.bf16.mxu0 %v809
    %849 = vmatmul.mubr.bf16.gmra.mrb[0].mxu0 %v808
    %v850 = vpop.f32.mrb[0].mxu0
    %v851 = vadd.f32 0.0, %v850
    %v852 = vpop.f32.mrb[0].mxu0
    %v853 = vpop.f32.mrb[0].mxu0
    %v854 = vpop.f32.mrb[0].mxu0
    %855 = vdwg.mxu0
    %856 = vmatprep.subr.bf16.mxu0 0
    %857 = vmatpush1.bf16.msra.mxu0 %v525
    %858 = vmatprep.subr.bf16.mxu0 0
    %859 = vmatpush1.bf16.msra.mxu0 %v526
    %860 = vmatprep.subr.bf16.mxu0 0
    %861 = vmatpush1.bf16.msra.mxu0 %v527
    %862 = vmatprep.subr.bf16.mxu0 0
    %863 = vmatpush1.bf16.msra.mxu0 %v528
    %864 = vmatprep.subr.bf16.mxu0 0
    %865 = vmatpush1.bf16.msra.mxu0 %v529
    %866 = vmatprep.subr.bf16.mxu0 0
    %867 = vmatpush1.bf16.msra.mxu0 %v530
    %868 = vmatprep.subr.bf16.mxu0 0
    %869 = vmatpush1.bf16.msra.mxu0 %v531
    %870 = vmatprep.subr.bf16.mxu0 0
    %871 = vmatpush1.bf16.msra.mxu0 %v532
    %872 = vmatprep.subr.bf16.mxu0 0
    %873 = vmatpush1.bf16.msra.mxu0 %v533
    %874 = vmatprep.subr.bf16.mxu0 0
    %875 = vmatpush1.bf16.msra.mxu0 %v534
    %876 = vmatprep.subr.bf16.mxu0 0
    %877 = vmatpush1.bf16.msra.mxu0 %v535
    %878 = vmatprep.subr.bf16.mxu0 0
    %879 = vmatpush1.bf16.msra.mxu0 %v536
    %880 = vmatprep.subr.bf16.mxu0 0
    %881 = vmatpush1.bf16.msra.mxu0 %v537
    %882 = vmatprep.subr.bf16.mxu0 0
    %883 = vmatpush1.bf16.msra.mxu0 %v538
    %884 = vmatprep.subr.bf16.mxu0 0
    %885 = vmatpush1.bf16.msra.mxu0 %v539
    %886 = vmatprep.subr.bf16.mxu0 0
    %887 = vmatpush1.bf16.msra.mxu0 %v540
    %888 = vmatprep.mubr.bf16.mxu0 %v811
    %889 = vmatmul.mubr.bf16.gmra.mrb[0].mxu0 %v810
    %v890 = vpop.f32.mrb[0].mxu0
    %v891 = vadd.f32 %v851, %v890
    %v892 = vpop.f32.mrb[0].mxu0
    %v893 = vpop.f32.mrb[0].mxu0
    %v894 = vpop.f32.mrb[0].mxu0
    %895 = vdwg.mxu0
    %896 = vmatprep.subr.bf16.mxu0 0
    %897 = vmatpush1.bf16.msra.mxu0 %v541
    %898 = vmatprep.subr.bf16.mxu0 0
    %899 = vmatpush1.bf16.msra.mxu0 %v542
    %900 = vmatprep.subr.bf16.mxu0 0
    %901 = vmatpush1.bf16.msra.mxu0 %v543
    %902 = vmatprep.subr.bf16.mxu0 0
    %903 = vmatpush1.bf16.msra.mxu0 %v544
    %904 = vmatprep.subr.bf16.mxu0 0
    %905 = vmatpush1.bf16.msra.mxu0 %v545
    %906 = vmatprep.subr.bf16.mxu0 0
    %907 = vmatpush1.bf16.msra.mxu0 %v546
    %908 = vmatprep.subr.bf16.mxu0 0
    %909 = vmatpush1.bf16.msra.mxu0 %v547
    %910 = vmatprep.subr.bf16.mxu0 0
    %911 = vmatpush1.bf16.msra.mxu0 %v548
    %912 = vmatprep.subr.bf16.mxu0 0
    %913 = vmatpush1.bf16.msra.mxu0 %v549
    %914 = vmatprep.subr.bf16.mxu0 0
    %915 = vmatpush1.bf16.msra.mxu0 %v550
    %916 = vmatprep.subr.bf16.mxu0 0
    %917 = vmatpush1.bf16.msra.mxu0 %v551
    %918 = vmatprep.subr.bf16.mxu0 0
    %919 = vmatpush1.bf16.msra.mxu0 %v552
    %920 = vmatprep.subr.bf16.mxu0 0
    %921 = vmatpush1.bf16.msra.mxu0 %v553
    %922 = vmatprep.subr.bf16.mxu0 0
    %923 = vmatpush1.bf16.msra.mxu0 %v554
    %924 = vmatprep.subr.bf16.mxu0 0
    %925 = vmatpush1.bf16.msra.mxu0 %v555
    %926 = vmatprep.subr.bf16.mxu0 0
    %927 = vmatpush1.bf16.msra.mxu0 %v556
    %928 = vmatprep.mubr.bf16.mxu0 %v813
    %929 = vmatmul.mubr.bf16.gmra.mrb[0].mxu0 %v812
    %v930 = vpop.f32.mrb[0].mxu0
    %v931 = vadd.f32 %v891, %v930
    %v932 = vpop.f32.mrb[0].mxu0
    %v933 = vpop.f32.mrb[0].mxu0
    %v934 = vpop.f32.mrb[0].mxu0
    %935 = vdwg.mxu0
    %936 = vmatprep.subr.bf16.mxu0 0
    %937 = vmatpush1.bf16.msra.mxu0 %v557
    %938 = vmatprep.subr.bf16.mxu0 0
    %939 = vmatpush1.bf16.msra.mxu0 %v558
    %940 = vmatprep.subr.bf16.mxu0 0
    %941 = vmatpush1.bf16.msra.mxu0 %v559
    %942 = vmatprep.subr.bf16.mxu0 0
    %943 = vmatpush1.bf16.msra.mxu0 %v560
    %944 = vmatprep.subr.bf16.mxu0 0
    %945 = vmatpush1.bf16.msra.mxu0 %v561
    %946 = vmatprep.subr.bf16.mxu0 0
    %947 = vmatpush1.bf16.msra.mxu0 %v562
    %948 = vmatprep.subr.bf16.mxu0 0
    %949 = vmatpush1.bf16.msra.mxu0 %v563
    %950 = vmatprep.subr.bf16.mxu0 0
    %951 = vmatpush1.bf16.msra.mxu0 %v564
    %952 = vmatprep.subr.bf16.mxu0 0
    %953 = vmatpush1.bf16.msra.mxu0 %v565
    %954 = vmatprep.subr.bf16.mxu0 0
    %955 = vmatpush1.bf16.msra.mxu0 %v566
    %956 = vmatprep.subr.bf16.mxu0 0
    %957 = vmatpush1.bf16.msra.mxu0 %v567
    %958 = vmatprep.subr.bf16.mxu0 0
    %959 = vmatpush1.bf16.msra.mxu0 %v568
    %960 = vmatprep.subr.bf16.mxu0 0
    %961 = vmatpush1.bf16.msra.mxu0 %v569
    %962 = vmatprep.subr.bf16.mxu0 0
    %963 = vmatpush1.bf16.msra.mxu0 %v570
    %964 = vmatprep.subr.bf16.mxu0 0
    %965 = vmatpush1.bf16.msra.mxu0 %v571
    %966 = vmatprep.subr.bf16.mxu0 0
    %967 = vmatpush1.bf16.msra.mxu0 %v572
    %968 = vmatprep.mubr.bf16.mxu0 %v815
    %969 = vmatmul.mubr.bf16.gmra.mrb[0].mxu0 %v814
    %v970 = vpop.f32.mrb[0].mxu0
    %v971 = vadd.f32 %v931, %v970
    %v972 = vpop.f32.mrb[0].mxu0
    %v973 = vpop.f32.mrb[0].mxu0
    %v974 = vpop.f32.mrb[0].mxu0
    %975 = vdwg.mxu0
    %v976 = vadd.f32 %v799, %v971
    %977 = vst [vmem:[#allocation3] sm:$0xff] %v976
    %v978 = vld [vmem:[#allocation4] sm:$0xff]
    %v979 = vld [vmem:[#allocation10] sm:$0xff]
    %v980 = vld [vmem:[#allocation10 + $0x8] sm:$0xff]
    %v981 = vld [vmem:[#allocation10 + $0x10] sm:$0xff]
    %v982 = vld [vmem:[#allocation10 + $0x18] sm:$0xff]
    %v983 = vld [vmem:[#allocation10 + $0x20] sm:$0xff]
    %v984 = vld [vmem:[#allocation10 + $0x28] sm:$0xff]
    %v985 = vld [vmem:[#allocation10 + $0x30] sm:$0xff]
    %v986 = vld [vmem:[#allocation10 + $0x38] sm:$0xff]
    %v987 = vpack.c.bf16 %v979, %v979
    %v988 = vpack.c.bf16 %v980, %v980
    %v989 = vpack.c.bf16 %v981, %v981
    %v990 = vpack.c.bf16 %v982, %v982
    %v991 = vpack.c.bf16 %v983, %v983
    %v992 = vpack.c.bf16 %v984, %v984
    %v993 = vpack.c.bf16 %v985, %v985
    %v994 = vpack.c.bf16 %v986, %v986
    %995 = vmatprep.subr.bf16.mxu0 0
    %996 = vmatpush1.bf16.msra.mxu0 %v509
    %997 = vmatprep.subr.bf16.mxu0 0
    %998 = vmatpush1.bf16.msra.mxu0 %v510
    %999 = vmatprep.subr.bf16.mxu0 0
    %1000 = vmatpush1.bf16.msra.mxu0 %v511
    %1001 = vmatprep.subr.bf16.mxu0 0
    %1002 = vmatpush1.bf16.msra.mxu0 %v512
    %1003 = vmatprep.subr.bf16.mxu0 0
    %1004 = vmatpush1.bf16.msra.mxu0 %v513
    %1005 = vmatprep.subr.bf16.mxu0 0
    %1006 = vmatpush1.bf16.msra.mxu0 %v514
    %1007 = vmatprep.subr.bf16.mxu0 0
    %1008 = vmatpush1.bf16.msra.mxu0 %v515
    %1009 = vmatprep.subr.bf16.mxu0 0
    %1010 = vmatpush1.bf16.msra.mxu0 %v516
    %1011 = vmatprep.subr.bf16.mxu0 0
    %1012 = vmatpush1.bf16.msra.mxu0 %v517
    %1013 = vmatprep.subr.bf16.mxu0 0
    %1014 = vmatpush1.bf16.msra.mxu0 %v518
    %1015 = vmatprep.subr.bf16.mxu0 0
    %1016 = vmatpush1.bf16.msra.mxu0 %v519
    %1017 = vmatprep.subr.bf16.mxu0 0
    %1018 = vmatpush1.bf16.msra.mxu0 %v520
    %1019 = vmatprep.subr.bf16.mxu0 0
    %1020 = vmatpush1.bf16.msra.mxu0 %v521
    %1021 = vmatprep.subr.bf16.mxu0 0
    %1022 = vmatpush1.bf16.msra.mxu0 %v522
    %1023 = vmatprep.subr.bf16.mxu0 0
    %1024 = vmatpush1.bf16.msra.mxu0 %v523
    %1025 = vmatprep.subr.bf16.mxu0 0
    %1026 = vmatpush1.bf16.msra.mxu0 %v524
    %1027 = vmatprep.mubr.bf16.mxu0 %v988
    %1028 = vmatmul.mubr.bf16.gmra.mrb[0].mxu0 %v987
    %v1029 = vpop.f32.mrb[0].mxu0
    %v1030 = vadd.f32 0.0, %v1029
    %v1031 = vpop.f32.mrb[0].mxu0
    %v1032 = vpop.f32.mrb[0].mxu0
    %v1033 = vpop.f32.mrb[0].mxu0
    %1034 = vdwg.mxu0
    %1035 = vmatprep.subr.bf16.mxu0 0
    %1036 = vmatpush1.bf16.msra.mxu0 %v525
    %1037 = vmatprep.subr.bf16.mxu0 0
    %1038 = vmatpush1.bf16.msra.mxu0 %v526
    %1039 = vmatprep.subr.bf16.mxu0 0
    %1040 = vmatpush1.bf16.msra.mxu0 %v527
    %1041 = vmatprep.subr.bf16.mxu0 0
    %1042 = vmatpush1.bf16.msra.mxu0 %v528
    %1043 = vmatprep.subr.bf16.mxu0 0
    %1044 = vmatpush1.bf16.msra.mxu0 %v529
    %1045 = vmatprep.subr.bf16.mxu0 0
    %1046 = vmatpush1.bf16.msra.mxu0 %v530
    %1047 = vmatprep.subr.bf16.mxu0 0
    %1048 = vmatpush1.bf16.msra.mxu0 %v531
    %1049 = vmatprep.subr.bf16.mxu0 0
    %1050 = vmatpush1.bf16.msra.mxu0 %v532
    %1051 = vmatprep.subr.bf16.mxu0 0
    %1052 = vmatpush1.bf16.msra.mxu0 %v533
    %1053 = vmatprep.subr.bf16.mxu0 0
    %1054 = vmatpush1.bf16.msra.mxu0 %v534
    %1055 = vmatprep.subr.bf16.mxu0 0
    %1056 = vmatpush1.bf16.msra.mxu0 %v535
    %1057 = vmatprep.subr.bf16.mxu0 0
    %1058 = vmatpush1.bf16.msra.mxu0 %v536
    %1059 = vmatprep.subr.bf16.mxu0 0
    %1060 = vmatpush1.bf16.msra.mxu0 %v537
    %1061 = vmatprep.subr.bf16.mxu0 0
    %1062 = vmatpush1.bf16.msra.mxu0 %v538
    %1063 = vmatprep.subr.bf16.mxu0 0
    %1064 = vmatpush1.bf16.msra.mxu0 %v539
    %1065 = vmatprep.subr.bf16.mxu0 0
    %1066 = vmatpush1.bf16.msra.mxu0 %v540
    %1067 = vmatprep.mubr.bf16.mxu0 %v990
    %1068 = vmatmul.mubr.bf16.gmra.mrb[0].mxu0 %v989
    %v1069 = vpop.f32.mrb[0].mxu0
    %v1070 = vadd.f32 %v1030, %v1069
    %v1071 = vpop.f32.mrb[0].mxu0
    %v1072 = vpop.f32.mrb[0].mxu0
    %v1073 = vpop.f32.mrb[0].mxu0
    %1074 = vdwg.mxu0
    %1075 = vmatprep.subr.bf16.mxu0 0
    %1076 = vmatpush1.bf16.msra.mxu0 %v541
    %1077 = vmatprep.subr.bf16.mxu0 0
    %1078 = vmatpush1.bf16.msra.mxu0 %v542
    %1079 = vmatprep.subr.bf16.mxu0 0
    %1080 = vmatpush1.bf16.msra.mxu0 %v543
    %1081 = vmatprep.subr.bf16.mxu0 0
    %1082 = vmatpush1.bf16.msra.mxu0 %v544
    %1083 = vmatprep.subr.bf16.mxu0 0
    %1084 = vmatpush1.bf16.msra.mxu0 %v545
    %1085 = vmatprep.subr.bf16.mxu0 0
    %1086 = vmatpush1.bf16.msra.mxu0 %v546
    %1087 = vmatprep.subr.bf16.mxu0 0
    %1088 = vmatpush1.bf16.msra.mxu0 %v547
    %1089 = vmatprep.subr.bf16.mxu0 0
    %1090 = vmatpush1.bf16.msra.mxu0 %v548
    %1091 = vmatprep.subr.bf16.mxu0 0
    %1092 = vmatpush1.bf16.msra.mxu0 %v549
    %1093 = vmatprep.subr.bf16.mxu0 0
    %1094 = vmatpush1.bf16.msra.mxu0 %v550
    %1095 = vmatprep.subr.bf16.mxu0 0
    %1096 = vmatpush1.bf16.msra.mxu0 %v551
    %1097 = vmatprep.subr.bf16.mxu0 0
    %1098 = vmatpush1.bf16.msra.mxu0 %v552
    %1099 = vmatprep.subr.bf16.mxu0 0
    %1100 = vmatpush1.bf16.msra.mxu0 %v553
    %1101 = vmatprep.subr.bf16.mxu0 0
    %1102 = vmatpush1.bf16.msra.mxu0 %v554
    %1103 = vmatprep.subr.bf16.mxu0 0
    %1104 = vmatpush1.bf16.msra.mxu0 %v555
    %1105 = vmatprep.subr.bf16.mxu0 0
    %1106 = vmatpush1.bf16.msra.mxu0 %v556
    %1107 = vmatprep.mubr.bf16.mxu0 %v992
    %1108 = vmatmul.mubr.bf16.gmra.mrb[0].mxu0 %v991
    %v1109 = vpop.f32.mrb[0].mxu0
    %v1110 = vadd.f32 %v1070, %v1109
    %v1111 = vpop.f32.mrb[0].mxu0
    %v1112 = vpop.f32.mrb[0].mxu0
    %v1113 = vpop.f32.mrb[0].mxu0
    %1114 = vdwg.mxu0
    %1115 = vmatprep.subr.bf16.mxu0 0
    %1116 = vmatpush1.bf16.msra.mxu0 %v557
    %1117 = vmatprep.subr.bf16.mxu0 0
    %1118 = vmatpush1.bf16.msra.mxu0 %v558
    %1119 = vmatprep.subr.bf16.mxu0 0
    %1120 = vmatpush1.bf16.msra.mxu0 %v559
    %1121 = vmatprep.subr.bf16.mxu0 0
    %1122 = vmatpush1.bf16.msra.mxu0 %v560
    %1123 = vmatprep.subr.bf16.mxu0 0
    %1124 = vmatpush1.bf16.msra.mxu0 %v561
    %1125 = vmatprep.subr.bf16.mxu0 0
    %1126 = vmatpush1.bf16.msra.mxu0 %v562
    %1127 = vmatprep.subr.bf16.mxu0 0
    %1128 = vmatpush1.bf16.msra.mxu0 %v563
    %1129 = vmatprep.subr.bf16.mxu0 0
    %1130 = vmatpush1.bf16.msra.mxu0 %v564
    %1131 = vmatprep.subr.bf16.mxu0 0
    %1132 = vmatpush1.bf16.msra.mxu0 %v565
    %1133 = vmatprep.subr.bf16.mxu0 0
    %1134 = vmatpush1.bf16.msra.mxu0 %v566
    %1135 = vmatprep.subr.bf16.mxu0 0
    %1136 = vmatpush1.bf16.msra.mxu0 %v567
    %1137 = vmatprep.subr.bf16.mxu0 0
    %1138 = vmatpush1.bf16.msra.mxu0 %v568
    %1139 = vmatprep.subr.bf16.mxu0 0
    %1140 = vmatpush1.bf16.msra.mxu0 %v569
    %1141 = vmatprep.subr.bf16.mxu0 0
    %1142 = vmatpush1.bf16.msra.mxu0 %v570
    %1143 = vmatprep.subr.bf16.mxu0 0
    %1144 = vmatpush1.bf16.msra.mxu0 %v571
    %1145 = vmatprep.subr.bf16.mxu0 0
    %1146 = vmatpush1.bf16.msra.mxu0 %v572
    %1147 = vmatprep.mubr.bf16.mxu0 %v994
    %1148 = vmatmul.mubr.bf16.gmra.mrb[0].mxu0 %v993
    %v1149 = vpop.f32.mrb[0].mxu0
    %v1150 = vadd.f32 %v1110, %v1149
    %v1151 = vpop.f32.mrb[0].mxu0
    %v1152 = vpop.f32.mrb[0].mxu0
    %v1153 = vpop.f32.mrb[0].mxu0
    %1154 = vdwg.mxu0
    %v1155 = vadd.f32 %v978, %v1150
    %1156 = vst [vmem:[#allocation4] sm:$0xff] %v1155
    // Predicated region
    $region54: #{tpu_custom_call.1} parent=1 // pred_check
      %p1157 = pneg %p94
    $region55: #{tpu_custom_call.1} parent=1 // pred_check_branch
      %1159 = sbr.rel (%p1157) target = $region57
    $region56: #{tpu_custom_call.1} parent=1 // pred_region
      %v1160 = vld [vmem:[#allocation13] sm:$0xf]
      %v1161 = vld [vmem:[#allocation13 + $0x4] sm:$0xf]
      %v1162 = vld [vmem:[#allocation13 + $0x8] sm:$0xf]
      %v1163 = vld [vmem:[#allocation13 + $0xc] sm:$0xf]
      %v1164 = vld [vmem:[#allocation13 + $0x10] sm:$0xf]
      %v1165 = vld [vmem:[#allocation13 + $0x14] sm:$0xf]
      %v1166 = vld [vmem:[#allocation13 + $0x18] sm:$0xf]
      %v1167 = vld [vmem:[#allocation13 + $0x1c] sm:$0xf]
      %v1168 = vld [vmem:[#allocation13 + $0x20] sm:$0xf]
      %v1169 = vld [vmem:[#allocation13 + $0x24] sm:$0xf]
      %v1170 = vld [vmem:[#allocation13 + $0x28] sm:$0xf]
      %v1171 = vld [vmem:[#allocation13 + $0x2c] sm:$0xf]
      %v1172 = vld [vmem:[#allocation13 + $0x30] sm:$0xf]
      %v1173 = vld [vmem:[#allocation13 + $0x34] sm:$0xf]
      %v1174 = vld [vmem:[#allocation13 + $0x38] sm:$0xf]
      %v1175 = vld [vmem:[#allocation13 + $0x3c] sm:$0xf]
      %v1176 = vld [vmem:[%s6] sm:$0x1]
      %v1177 = vld [vmem:[#allocation2] sm:$0xff]
      %v1178 = vmax.f32 %v1177, 0.0
      %v1179 = vpack.c.bf16 %v1178, %v1178
      %v1181 = vlaneseq
      %v1182 = vshrl.u32 %v1181, 7
      %v1183 = vsub.s32 0, %v1182
      %v1184 = vrot.slane %v1176, %v1183
      %v1202 = vunpack.c.l.b16 %v1160
      %v1203 = vunpack.c.l.b16 %v1161
      %v1204 = vunpack.c.l.b16 %v1162
      %v1205 = vunpack.c.l.b16 %v1163
      %v1206 = vunpack.c.l.b16 %v1164
      %v1207 = vunpack.c.l.b16 %v1165
      %v1208 = vunpack.c.l.b16 %v1166
      %v1209 = vunpack.c.l.b16 %v1167
      %v1210 = vunpack.c.l.b16 %v1168
      %v1211 = vunpack.c.l.b16 %v1169
      %v1212 = vunpack.c.l.b16 %v1170
      %v1213 = vunpack.c.l.b16 %v1171
      %v1214 = vunpack.c.l.b16 %v1172
      %v1215 = vunpack.c.l.b16 %v1173
      %v1216 = vunpack.c.l.b16 %v1174
      %v1217 = vunpack.c.l.b16 %v1175
      %v1218 = vpack.c.b16 %v1203, %v1202
      %v1219 = vpack.c.b16 %v1205, %v1204
      %v1220 = vpack.c.b16 %v1207, %v1206
      %v1221 = vpack.c.b16 %v1209, %v1208
      %v1222 = vpack.c.b16 %v1211, %v1210
      %v1223 = vpack.c.b16 %v1213, %v1212
      %v1224 = vpack.c.b16 %v1215, %v1214
      %v1225 = vpack.c.b16 %v1217, %v1216
      %1234 = vmatprep.subr.bf16.mxu0 0
      %1235 = vmatpush1.bf16.msra.mxu0 %v1218
      %1236 = vmatprep.subr.bf16.mxu0 0
      %1237 = vmatpush1.bf16.msra.mxu0 %v1219
      %1238 = vmatprep.subr.bf16.mxu0 0
      %1239 = vmatpush1.bf16.msra.mxu0 %v1220
      %1240 = vmatprep.subr.bf16.mxu0 0
      %1241 = vmatpush1.bf16.msra.mxu0 %v1221
      %1242 = vmatprep.subr.bf16.mxu0 0
      %1243 = vmatpush1.bf16.msra.mxu0 %v1222
      %1244 = vmatprep.subr.bf16.mxu0 0
      %1245 = vmatpush1.bf16.msra.mxu0 %v1223
      %1246 = vmatprep.subr.bf16.mxu0 0
      %1247 = vmatpush1.bf16.msra.mxu0 %v1224
      %1248 = vmatprep.subr.bf16.mxu0 0
      %1249 = vmatpush1.bf16.msra.mxu0 %v1225
      %1250 = vmatprep.subr.bf16.mxu0 0
      %1251 = vmatpush1.bf16.msra.mxu0 0
      %1252 = vmatprep.subr.bf16.mxu0 0
      %1253 = vmatpush1.bf16.msra.mxu0 0
      %1254 = vmatprep.subr.bf16.mxu0 0
      %1255 = vmatpush1.bf16.msra.mxu0 0
      %1256 = vmatprep.subr.bf16.mxu0 0
      %1257 = vmatpush1.bf16.msra.mxu0 0
      %1258 = vmatprep.subr.bf16.mxu0 0
      %1259 = vmatpush1.bf16.msra.mxu0 0
      %1260 = vmatprep.subr.bf16.mxu0 0
      %1261 = vmatpush1.bf16.msra.mxu0 0
      %1262 = vmatprep.subr.bf16.mxu0 0
      %1263 = vmatpush1.bf16.msra.mxu0 0
      %1264 = vmatprep.subr.bf16.mxu0 0
      %1265 = vmatpush1.bf16.msra.mxu0 0
      %1266 = vmatprep.mubr.bf16.mxu0 0
      %1267 = vmatmul.mubr.bf16.gmra.mrb[0].mxu0 %v1179
      %v1268 = vpop.f32.mrb[0].mxu0
      %v1269 = vadd.f32 %v1184, %v1268
      %v1270 = vpop.f32.mrb[0].mxu0
      %v1271 = vpop.f32.mrb[0].mxu0
      %v1272 = vpop.f32.mrb[0].mxu0
      %1273 = vdwg.mxu0
      %1274 = vst [vmem:[#allocation14] sm:$0xff] %v1269
      %v1275 = vld [vmem:[#allocation3] sm:$0xff]
      %v1276 = vmax.f32 %v1275, 0.0
      %v1277 = vpack.c.bf16 %v1276, %v1276
      %1278 = vmatprep.subr.bf16.mxu0 0
      %1279 = vmatpush1.bf16.msra.mxu0 %v1218
      %1280 = vmatprep.subr.bf16.mxu0 0
      %1281 = vmatpush1.bf16.msra.mxu0 %v1219
      %1282 = vmatprep.subr.bf16.mxu0 0
      %1283 = vmatpush1.bf16.msra.mxu0 %v1220
      %1284 = vmatprep.subr.bf16.mxu0 0
      %1285 = vmatpush1.bf16.msra.mxu0 %v1221
      %1286 = vmatprep.subr.bf16.mxu0 0
      %1287 = vmatpush1.bf16.msra.mxu0 %v1222
      %1288 = vmatprep.subr.bf16.mxu0 0
      %1289 = vmatpush1.bf16.msra.mxu0 %v1223
      %1290 = vmatprep.subr.bf16.mxu0 0
      %1291 = vmatpush1.bf16.msra.mxu0 %v1224
      %1292 = vmatprep.subr.bf16.mxu0 0
      %1293 = vmatpush1.bf16.msra.mxu0 %v1225
      %1294 = vmatprep.subr.bf16.mxu0 0
      %1295 = vmatpush1.bf16.msra.mxu0 0
      %1296 = vmatprep.subr.bf16.mxu0 0
      %1297 = vmatpush1.bf16.msra.mxu0 0
      %1298 = vmatprep.subr.bf16.mxu0 0
      %1299 = vmatpush1.bf16.msra.mxu0 0
      %1300 = vmatprep.subr.bf16.mxu0 0
      %1301 = vmatpush1.bf16.msra.mxu0 0
      %1302 = vmatprep.subr.bf16.mxu0 0
      %1303 = vmatpush1.bf16.msra.mxu0 0
      %1304 = vmatprep.subr.bf16.mxu0 0
      %1305 = vmatpush1.bf16.msra.mxu0 0
      %1306 = vmatprep.subr.bf16.mxu0 0
      %1307 = vmatpush1.bf16.msra.mxu0 0
      %1308 = vmatprep.subr.bf16.mxu0 0
      %1309 = vmatpush1.bf16.msra.mxu0 0
      %1310 = vmatprep.mubr.bf16.mxu0 0
      %1311 = vmatmul.mubr.bf16.gmra.mrb[0].mxu0 %v1277
      %v1312 = vpop.f32.mrb[0].mxu0
      %v1313 = vadd.f32 %v1184, %v1312
      %v1314 = vpop.f32.mrb[0].mxu0
      %v1315 = vpop.f32.mrb[0].mxu0
      %v1316 = vpop.f32.mrb[0].mxu0
      %1317 = vdwg.mxu0
      %1318 = vst [vmem:[#allocation15] sm:$0xff] %v1313
      %v1319 = vld [vmem:[#allocation4] sm:$0xff]
      %v1320 = vmax.f32 %v1319, 0.0
      %v1321 = vpack.c.bf16 %v1320, %v1320
      %1322 = vmatprep.subr.bf16.mxu0 0
      %1323 = vmatpush1.bf16.msra.mxu0 %v1218
      %1324 = vmatprep.subr.bf16.mxu0 0
      %1325 = vmatpush1.bf16.msra.mxu0 %v1219
      %1326 = vmatprep.subr.bf16.mxu0 0
      %1327 = vmatpush1.bf16.msra.mxu0 %v1220
      %1328 = vmatprep.subr.bf16.mxu0 0
      %1329 = vmatpush1.bf16.msra.mxu0 %v1221
      %1330 = vmatprep.subr.bf16.mxu0 0
      %1331 = vmatpush1.bf16.msra.mxu0 %v1222
      %1332 = vmatprep.subr.bf16.mxu0 0
      %1333 = vmatpush1.bf16.msra.mxu0 %v1223
      %1334 = vmatprep.subr.bf16.mxu0 0
      %1335 = vmatpush1.bf16.msra.mxu0 %v1224
      %1336 = vmatprep.subr.bf16.mxu0 0
      %1337 = vmatpush1.bf16.msra.mxu0 %v1225
      %1338 = vmatprep.subr.bf16.mxu0 0
      %1339 = vmatpush1.bf16.msra.mxu0 0
      %1340 = vmatprep.subr.bf16.mxu0 0
      %1341 = vmatpush1.bf16.msra.mxu0 0
      %1342 = vmatprep.subr.bf16.mxu0 0
      %1343 = vmatpush1.bf16.msra.mxu0 0
      %1344 = vmatprep.subr.bf16.mxu0 0
      %1345 = vmatpush1.bf16.msra.mxu0 0
      %1346 = vmatprep.subr.bf16.mxu0 0
      %1347 = vmatpush1.bf16.msra.mxu0 0
      %1348 = vmatprep.subr.bf16.mxu0 0
      %1349 = vmatpush1.bf16.msra.mxu0 0
      %1350 = vmatprep.subr.bf16.mxu0 0
      %1351 = vmatpush1.bf16.msra.mxu0 0
      %1352 = vmatprep.subr.bf16.mxu0 0
      %1353 = vmatpush1.bf16.msra.mxu0 0
      %1354 = vmatprep.mubr.bf16.mxu0 0
      %1355 = vmatmul.mubr.bf16.gmra.mrb[0].mxu0 %v1321
      %v1356 = vpop.f32.mrb[0].mxu0
      %v1357 = vadd.f32 %v1184, %v1356
      %v1358 = vpop.f32.mrb[0].mxu0
      %v1359 = vpop.f32.mrb[0].mxu0
      %v1360 = vpop.f32.mrb[0].mxu0
      %1361 = vdwg.mxu0
      %1362 = vst [vmem:[#allocation17] sm:$0xff] %v1357
    $region57: #{tpu_custom_call.1} parent=1 // pred_fallthru
      _
    // Predicated region
    $region58: #{tpu_custom_call.1} parent=1 // pred_check
      _
    $region59: #{tpu_custom_call.1} parent=1 // pred_check_branch
      %1364 = sbr.rel (0) target = $region61
    $region60: #{tpu_custom_call.1} parent=1 // pred_region
      %s1366 = ssub.s32 128, 128
      %1367 = vsyncadd [#allocation7], %s1366
      %s1369 = sshll.u32 [#allocation14], 4
      %s1370 = int_to_ptr.vmem [resolvable:$true] %s1369
      %1372 = dma.vmem_to_hbm [thread:$0]  %s1370, 128, %s7, [#allocation7]
    $region61: #{tpu_custom_call.1} parent=1 // pred_fallthru
      _
    // Predicated region
    $region62: #{tpu_custom_call.1} parent=1 // pred_check
      _
    $region63: #{tpu_custom_call.1} parent=1 // pred_check_branch
      %1374 = sbr.rel (0) target = $region65
    $region64: #{tpu_custom_call.1} parent=1 // pred_region
      %s1376 = ssub.s32 128, 128
      %1377 = vsyncadd [#allocation16], %s1376
      %s1379 = sshll.u32 [#allocation15], 4
      %s1380 = int_to_ptr.vmem [resolvable:$true] %s1379
      %1382 = dma.vmem_to_hbm [thread:$0]  %s1380, 128, %s8, [#allocation16]
    $region65: #{tpu_custom_call.1} parent=1 // pred_fallthru
      _
    // Predicated region
    $region66: #{tpu_custom_call.1} parent=1 // pred_check
      _
    $region67: #{tpu_custom_call.1} parent=1 // pred_check_branch
      %1384 = sbr.rel (0) target = $region69
    $region68: #{tpu_custom_call.1} parent=1 // pred_region
      %s1386 = ssub.s32 128, 128
      %1387 = vsyncadd [#allocation16], %s1386
      %s1389 = sshll.u32 [#allocation17], 4
      %s1390 = int_to_ptr.vmem [resolvable:$true] %s1389
      %1392 = dma.vmem_to_hbm [thread:$0]  %s1390, 128, %s9, [#allocation16]
    $region69: #{tpu_custom_call.1} parent=1 // pred_fallthru
      _
    // Predicated region
    $region70: #{tpu_custom_call.1} parent=1 // pred_check
      _
    $region71: #{tpu_custom_call.1} parent=1 // pred_check_branch
      %1394 = sbr.rel (0) target = $region73
    $region72: #{tpu_custom_call.1} parent=1 // pred_region
      %1395 = dma.done [#allocation7], 128
    $region73: #{tpu_custom_call.1} parent=1 // pred_fallthru
      _
    // Predicated region
    $region74: #{tpu_custom_call.1} parent=1 // pred_check
      _
    $region75: #{tpu_custom_call.1} parent=1 // pred_check_branch
      %1397 = sbr.rel (0) target = $region77
    $region76: #{tpu_custom_call.1} parent=1 // pred_region
      %1398 = dma.done [#allocation16], 128
    $region77: #{tpu_custom_call.1} parent=1 // pred_fallthru
      _
    // Predicated region
    $region78: #{tpu_custom_call.1} parent=1 // pred_check
      _
    $region79: #{tpu_custom_call.1} parent=1 // pred_check_branch
      %1400 = sbr.rel (0) target = $region81
    $region80: #{tpu_custom_call.1} parent=1 // pred_region
      %1401 = dma.done [#allocation16], 128
    $region81: #{tpu_custom_call.1} parent=1 // pred_fallthru
      _
    %1402 = vsyncpa [#allocation6], 1
    %1403 = vsyncpa [#allocation9], 1
    %1404 = vsyncpa [#allocation12], 1
    %1405 = vsyncpa [#allocation7], 1
    %1406 = vsyncpa [#allocation16], 1

</llo_original>
